<compile_context>
chip_gen: v6e
topology: v6e:2x2x1
jax: 0.10.0
libtpu: 0.0.40
codegen_flags: <defaults>
</compile_context>

<pallas_src>
import jax
import jax.numpy as jnp
from jax.experimental import pallas as pl
from jax.experimental.pallas import tpu as pltpu


def _round_up(x, m):
    return ((x + m - 1) // m) * m


def _sublane_multiple(dtype):
    bits = jnp.dtype(dtype).itemsize * 8
    if bits >= 32:
        return 8
    if bits == 16:
        return 16
    return 32


def _tpu_vmem_bytes():
    """Physical VMEM capacity; conservative (v7x-class) fallback."""
    try:
        info = pltpu.get_tpu_info()
        v = getattr(info, "vmem_capacity_bytes", None)
        if v:
            return int(v)
    except Exception:
        pass
    return 64 << 20


def _vmem_footprint_bytes(tile, max_h, flat_params):
    """Lane-padded, 4-byte-accounted VMEM footprint for one tiling choice."""
    lane = 128
    # Streamed slabs (xyz9, features, output): 2 buffers each, padded to 128
    # lanes regardless of their true channel count.
    stream = 3 * 2 * tile * lane * 4
    # ~4 live (tile, H) f32 intermediates, H lane-padded.
    interm = 4 * tile * _round_up(max_h, lane) * 4
    # Resident weights/biases (sublane+lane padded, x2 for pipelining bufs).
    wbytes = 0
    for a in flat_params:
        r, c = a.shape
        wbytes += _round_up(r, 8) * _round_up(c, lane) * 4
    return stream + interm + 2 * wbytes + (4 << 20)


# ---------------------------------------------------------------------------
# Kernel: full MLP for one tile of N points.  Layer 0 is two dots
# ([points|view_dirs|normals] slab and features); remaining layers are plain
# matmul + bias (+ relu).  Final layer: tanh then map to [0, 1].
# ---------------------------------------------------------------------------
def _make_rendering_kernel(n_layers):
    def kernel(xyz_ref, feat_ref, *rest):
        o_ref = rest[-1]
        w_b = rest[:-1]

        # ---- layer 0: two fused dots, LHS cast to the weight dtype so bf16
        # weights stay on the native bf16 MXU path (f32 accumulation).
        w0g, w0f, b0 = w_b[0], w_b[1], w_b[2]
        h = jnp.dot(xyz_ref[...].astype(w0g.dtype), w0g[...],
                    preferred_element_type=jnp.float32)
        h = h + jnp.dot(feat_ref[...].astype(w0f.dtype), w0f[...],
                        preferred_element_type=jnp.float32)
        h = h + b0[...].astype(jnp.float32)
        h = jnp.maximum(h, 0.0)

        # ---- remaining layers
        idx = 3
        for l in range(1, n_layers):
            w_ref, b_ref = w_b[idx], w_b[idx + 1]
            idx += 2
            h = jnp.dot(h.astype(w_ref.dtype), w_ref[...],
                        preferred_element_type=jnp.float32)
            h = h + b_ref[...].astype(jnp.float32)
            if l < n_layers - 1:
                h = jnp.maximum(h, 0.0)

        # normalize_output=True: tanh (f32 EUP, v5e-safe) then map to [0, 1].
        h = jnp.tanh(h)
        o_ref[...] = ((h + 1.0) * 0.5).astype(o_ref.dtype)

    return kernel


# ---------------------------------------------------------------------------
# Wrapper
# ---------------------------------------------------------------------------
def rendering_network_forward(points, normals, view_dirs, feature_vectors,
                              params, *, tile_n=None, out_dtype=None):
    """mode='idr' forward.  params: list of (W, b) with W (in_dim, out_dim),
    b (1, out_dim).  Weights may be f32 or bf16; accumulation is f32."""
    n = points.shape[0]
    f_dim = feature_vectors.shape[1]
    n_layers = len(params)
    d_out = params[-1][0].shape[1]
    if out_dtype is None:
        out_dtype = points.dtype

    # ---- hardware-derived budgets -----------------------------------------
    vmem_bytes = _tpu_vmem_bytes()
    # v7x-class (64 MiB VMEM) chips have 2 TensorCores; v5e/v6e (128 MiB) 1.
    num_tc = 2 if vmem_bytes <= (80 << 20) else 1
    vmem_cap = min(100 << 20, max(vmem_bytes - (16 << 20), 24 << 20))
    if tile_n is None:
        tile_n = 4096 if vmem_bytes >= (100 << 20) else 2048
    min_steps = 4 if num_tc == 2 else 2

    # ---- pack [points | view_dirs | normals] into one (N, 9) slab ---------
    xyz9 = jnp.concatenate([points, view_dirs, normals], axis=-1)

    # Split W0 by the 'idr' concat order: geometric 9 rows, then features.
    w0, b0 = params[0]
    w0_geo, w0_feat = w0[0:9], w0[9:]
    flat_params = [w0_geo, w0_feat, b0]
    for (w, b) in params[1:]:
        flat_params += [w, b]
    max_h = max(w.shape[1] for (w, _) in params)

    # ---- tile selection -----------------------------------------------------
    # Sublane multiple driven by the narrowest streamed/output dtype.
    sub = max(_sublane_multiple(xyz9.dtype),
              _sublane_multiple(feature_vectors.dtype),
              _sublane_multiple(out_dtype))
    tile = _round_up(min(tile_n, max(n, 1)), sub)
    # Shrink while (a) not enough grid steps for pipelining / megacore, or
    # (b) the lane-padded footprint would exceed this chip's VMEM cap.
    while tile > 256 and (pl.cdiv(n, tile) < min_steps or
                          _vmem_footprint_bytes(tile, max_h, flat_params)
                          > vmem_cap):
        tile = _round_up(max(tile // 2, sub), sub)

    steps = pl.cdiv(n, tile)
    # v7x: keep an even grid-step count so both TensorCores stay busy.
    if num_tc == 2 and steps > 1 and steps % 2 == 1:
        steps += 1
    n_pad = steps * tile

    if n_pad != n:
        pad = n_pad - n
        xyz9 = jnp.pad(xyz9, ((0, pad), (0, 0)))
        feature_vectors = jnp.pad(feature_vectors, ((0, pad), (0, 0)))

    def rep_spec(a):
        # Whole-array operand, constant block index -> resident across grid.
        return pl.BlockSpec(a.shape, lambda i: (0, 0))

    in_specs = [
        pl.BlockSpec((tile, 9), lambda i: (i, 0)),       # [pts|views|normals]
        pl.BlockSpec((tile, f_dim), lambda i: (i, 0)),   # feature_vectors
    ] + [rep_spec(a) for a in flat_params]

    vmem_limit = int(min(max(_vmem_footprint_bytes(tile, max_h, flat_params),
                             16 << 20), vmem_cap))

    out = pl.pallas_call(
        _make_rendering_kernel(n_layers),
        out_shape=jax.ShapeDtypeStruct((n_pad, d_out), out_dtype),
        grid_spec=pltpu.PrefetchScalarGridSpec(
            num_scalar_prefetch=0,
            grid=(steps,),
            in_specs=in_specs,
            out_specs=pl.BlockSpec((tile, d_out), lambda i: (i, 0)),
        ),
        compiler_params=pltpu.CompilerParams(
            dimension_semantics=("parallel",),
            vmem_limit_bytes=vmem_limit),
    )(xyz9, feature_vectors, *flat_params)

    if n_pad != n:
        out = out[:n]
    return out


# ---------------------------------------------------------------------------
# Parameter construction (deterministic, synthetic).  Reproduces weight_norm:
# W_eff = g * v / ||v||_row (per output neuron), folded on the host.
# ---------------------------------------------------------------------------
def make_params(key, layer_dims):
    params = []
    for l in range(len(layer_dims) - 1):
        key, kw, kb, kg = jax.random.split(key, 4)
        fan_in, fan_out = layer_dims[l], layer_dims[l + 1]
        bound = 1.0 / jnp.sqrt(fan_in)
        v = jax.random.uniform(kw, (fan_out, fan_in), jnp.float32, -bound, bound)
        b = jax.random.uniform(kb, (fan_out,), jnp.float32, -bound, bound)
        g = 1.0 + 0.01 * jax.random.uniform(kg, (fan_out,), jnp.float32)
        v_norm = jnp.sqrt(jnp.sum(v * v, axis=1, keepdims=True))
        w_eff = g[:, None] * v / v_norm                 # (out, in)
        params.append((w_eff.T, b[None, :]))            # W (in, out), b (1, out)
    return params


def cast_params(params, dtype):
    # bf16 at the HBM boundary for the weights; keep the (tiny, resident)
    # biases in f32 since the bias add happens in f32 anyway.
    return [(w.astype(dtype), b.astype(jnp.float32)) for (w, b) in params]


def reference_forward(points, normals, view_dirs, feature_vectors, params):
    x = jnp.concatenate([points, view_dirs, normals, feature_vectors], axis=-1)
    x = x.astype(jnp.float32)
    for l, (w, b) in enumerate(params):
        x = x @ w.astype(jnp.float32) + b.astype(jnp.float32)
        if l < len(params) - 1:
            x = jnp.maximum(x, 0.0)
    x = jnp.tanh(x)
    return (x + 1.0) / 2.0


if __name__ == "__main__":
    # Small, module-consistent shapes: feature_vector_size=32, mode='idr',
    # d_in=9 (points+view_dirs+normals), d_out=3, hidden dims=[64, 64].
    feature_vector_size = 32
    d_in, d_out = 9, 3
    hidden = [64, 64]
    layer_dims = [d_in + feature_vector_size] + hidden + [d_out]

    N = 1000  # deliberately not a tile multiple: exercises padding/tail path

    key = jax.random.PRNGKey(0)
    key, kp, kn, kv, kf = jax.random.split(key, 5)
    points = jax.random.normal(kp, (N, 3), jnp.float32)
    normals = jax.random.normal(kn, (N, 3), jnp.float32)
    view_dirs = jax.random.normal(kv, (N, 3), jnp.float32)
    feature_vectors = jax.random.normal(kf, (N, feature_vector_size), jnp.float32)

    params = make_params(key, layer_dims)
    ref = reference_forward(points, normals, view_dirs, feature_vectors, params)

    # f32 path (tight check).
    out = rendering_network_forward(points, normals, view_dirs,
                                    feature_vectors, params)
    out = jax.block_until_ready(out)
    assert out.shape == (N, d_out)
    err = float(jnp.max(jnp.abs(out - ref)))
    assert err < 1e-4, err

    # bf16-at-the-HBM-boundary path (bf16 MXU, f32 accumulation + f32 tanh
    # inside; looser tolerance as expected for bf16 I/O).
    bf = lambda a: a.astype(jnp.bfloat16)
    params_bf16 = cast_params(params, jnp.bfloat16)
    out_bf16 = rendering_network_forward(
        bf(points), bf(normals), bf(view_dirs), bf(feature_vectors),
        params_bf16, out_dtype=jnp.bfloat16)
    out_bf16 = jax.block_until_ready(out_bf16)
    err_bf16 = float(jnp.max(jnp.abs(out_bf16.astype(jnp.float32) - ref)))
    assert err_bf16 < 5e-2, err_bf16

    print("KERNEL_OK")
</pallas_src>

<mosaic_0001>
module attributes {stable_mosaic.version = 11 : i64} {
  func.func @kernel(%arg0: i32, %arg1: memref<256x9xf32, #tpu.memory_space<vmem>>, %arg2: memref<256x32xf32, #tpu.memory_space<vmem>>, %arg3: memref<9x64xf32, #tpu.memory_space<vmem>>, %arg4: memref<32x64xf32, #tpu.memory_space<vmem>>, %arg5: memref<1x64xf32, #tpu.memory_space<vmem>>, %arg6: memref<64x64xf32, #tpu.memory_space<vmem>>, %arg7: memref<1x64xf32, #tpu.memory_space<vmem>>, %arg8: memref<64x3xf32, #tpu.memory_space<vmem>>, %arg9: memref<1x3xf32, #tpu.memory_space<vmem>>, %arg10: memref<256x3xf32, #tpu.memory_space<vmem>>) attributes {dimension_semantics = [#tpu.dimension_semantics<parallel>], iteration_bounds = array<i64: 4>, scalar_prefetch = 0 : i64, scratch_operands = 0 : i64, tpu.core_type = #tpu.core_type<tc>, window_params = [{transform_indices = @transform_0, window_bounds = array<i64: 256, 9>}, {transform_indices = @transform_1, window_bounds = array<i64: 256, 32>}, {pipeline_mode = #tpu.pipeline_mode<synchronous>, transform_indices = @transform_2, window_bounds = array<i64: 9, 64>}, {pipeline_mode = #tpu.pipeline_mode<synchronous>, transform_indices = @transform_3, window_bounds = array<i64: 32, 64>}, {pipeline_mode = #tpu.pipeline_mode<synchronous>, transform_indices = @transform_4, window_bounds = array<i64: 1, 64>}, {pipeline_mode = #tpu.pipeline_mode<synchronous>, transform_indices = @transform_5, window_bounds = array<i64: 64, 64>}, {pipeline_mode = #tpu.pipeline_mode<synchronous>, transform_indices = @transform_6, window_bounds = array<i64: 1, 64>}, {pipeline_mode = #tpu.pipeline_mode<synchronous>, transform_indices = @transform_7, window_bounds = array<i64: 64, 3>}, {pipeline_mode = #tpu.pipeline_mode<synchronous>, transform_indices = @transform_8, window_bounds = array<i64: 1, 3>}, {transform_indices = @transform_9, window_bounds = array<i64: 256, 3>}]} {
    %c0 = arith.constant 0 : index
    %c0_0 = arith.constant 0 : index
    %0 = vector.load %arg1[%c0, %c0_0] : memref<256x9xf32, #tpu.memory_space<vmem>>, vector<256x9xf32>
    %c0_1 = arith.constant 0 : index
    %c0_2 = arith.constant 0 : index
    %1 = vector.load %arg3[%c0_1, %c0_2] : memref<9x64xf32, #tpu.memory_space<vmem>>, vector<9x64xf32>
    %cst = arith.constant dense<0.000000e+00> : vector<256x64xf32>
    %2 = tpu.matmul %0, %1, %cst {dimension_numbers = #tpu.dot_dimension_numbers<[1], [0], [0], [1], [0, 0, 1, 1], [], []>} : vector<256x9xf32>, vector<9x64xf32>, vector<256x64xf32> -> vector<256x64xf32>
    %c0_3 = arith.constant 0 : index
    %c0_4 = arith.constant 0 : index
    %3 = vector.load %arg2[%c0_3, %c0_4] : memref<256x32xf32, #tpu.memory_space<vmem>>, vector<256x32xf32>
    %c0_5 = arith.constant 0 : index
    %c0_6 = arith.constant 0 : index
    %4 = vector.load %arg4[%c0_5, %c0_6] : memref<32x64xf32, #tpu.memory_space<vmem>>, vector<32x64xf32>
    %cst_7 = arith.constant dense<0.000000e+00> : vector<256x64xf32>
    %5 = tpu.matmul %3, %4, %cst_7 {dimension_numbers = #tpu.dot_dimension_numbers<[1], [0], [0], [1], [0, 0, 1, 1], [], []>} : vector<256x32xf32>, vector<32x64xf32>, vector<256x64xf32> -> vector<256x64xf32>
    %6 = arith.addf %2, %5 : vector<256x64xf32>
    %c0_8 = arith.constant 0 : index
    %c0_9 = arith.constant 0 : index
    %7 = vector.load %arg5[%c0_8, %c0_9] : memref<1x64xf32, #tpu.memory_space<vmem>>, vector<1x64xf32>
    %8 = vector.broadcast %7 : vector<1x64xf32> to vector<256x64xf32>
    %9 = arith.addf %6, %8 : vector<256x64xf32>
    %cst_10 = arith.constant 0.000000e+00 : f32
    %10 = vector.broadcast %cst_10 : f32 to vector<256x64xf32>
    %11 = arith.maximumf %9, %10 : vector<256x64xf32>
    %c0_11 = arith.constant 0 : index
    %c0_12 = arith.constant 0 : index
    %12 = vector.load %arg6[%c0_11, %c0_12] : memref<64x64xf32, #tpu.memory_space<vmem>>, vector<64x64xf32>
    %cst_13 = arith.constant dense<0.000000e+00> : vector<256x64xf32>
    %13 = tpu.matmul %11, %12, %cst_13 {dimension_numbers = #tpu.dot_dimension_numbers<[1], [0], [0], [1], [0, 0, 1, 1], [], []>} : vector<256x64xf32>, vector<64x64xf32>, vector<256x64xf32> -> vector<256x64xf32>
    %c0_14 = arith.constant 0 : index
    %c0_15 = arith.constant 0 : index
    %14 = vector.load %arg7[%c0_14, %c0_15] : memref<1x64xf32, #tpu.memory_space<vmem>>, vector<1x64xf32>
    %15 = vector.broadcast %14 : vector<1x64xf32> to vector<256x64xf32>
    %16 = arith.addf %13, %15 : vector<256x64xf32>
    %cst_16 = arith.constant 0.000000e+00 : f32
    %17 = vector.broadcast %cst_16 : f32 to vector<256x64xf32>
    %18 = arith.maximumf %16, %17 : vector<256x64xf32>
    %c0_17 = arith.constant 0 : index
    %c0_18 = arith.constant 0 : index
    %19 = vector.load %arg8[%c0_17, %c0_18] : memref<64x3xf32, #tpu.memory_space<vmem>>, vector<64x3xf32>
    %cst_19 = arith.constant dense<0.000000e+00> : vector<256x3xf32>
    %20 = tpu.matmul %18, %19, %cst_19 {dimension_numbers = #tpu.dot_dimension_numbers<[1], [0], [0], [1], [0, 0, 1, 1], [], []>} : vector<256x64xf32>, vector<64x3xf32>, vector<256x3xf32> -> vector<256x3xf32>
    %c0_20 = arith.constant 0 : index
    %c0_21 = arith.constant 0 : index
    %21 = vector.load %arg9[%c0_20, %c0_21] : memref<1x3xf32, #tpu.memory_space<vmem>>, vector<1x3xf32>
    %22 = vector.broadcast %21 : vector<1x3xf32> to vector<256x3xf32>
    %23 = arith.addf %20, %22 : vector<256x3xf32>
    %24 = math.tanh %23 : vector<256x3xf32>
    %cst_22 = arith.constant 1.000000e+00 : f32
    %25 = vector.broadcast %cst_22 : f32 to vector<256x3xf32>
    %26 = arith.addf %24, %25 : vector<256x3xf32>
    %cst_23 = arith.constant 5.000000e-01 : f32
    %27 = vector.broadcast %cst_23 : f32 to vector<256x3xf32>
    %28 = arith.mulf %26, %27 : vector<256x3xf32>
    %c0_24 = arith.constant 0 : index
    %c0_25 = arith.constant 0 : index
    %29 = vector.load %arg10[%c0_24, %c0_25] : memref<256x3xf32, #tpu.memory_space<vmem>>, vector<256x3xf32>
    tpu.vector_store %arg10[%c0_24, %c0_25], %28 {strides = array<i32>} : memref<256x3xf32, #tpu.memory_space<vmem>>, vector<256x3xf32>,
    return
  }
  func.func @transform_0(%arg0: i32) -> (i32, i32) {
    %c0_i32 = arith.constant 0 : i32
    %c0_i32_0 = arith.constant 0 : i32
    return %arg0, %c0_i32 : i32, i32
  }
  func.func @transform_1(%arg0: i32) -> (i32, i32) {
    %c0_i32 = arith.constant 0 : i32
    %c0_i32_0 = arith.constant 0 : i32
    return %arg0, %c0_i32 : i32, i32
  }
  func.func @transform_2(%arg0: i32) -> (i32, i32) {
    %c0_i32 = arith.constant 0 : i32
    %c0_i32_0 = arith.constant 0 : i32
    %c0_i32_1 = arith.constant 0 : i32
    return %c0_i32, %c0_i32_0 : i32, i32
  }
  func.func @transform_3(%arg0: i32) -> (i32, i32) {
    %c0_i32 = arith.constant 0 : i32
    %c0_i32_0 = arith.constant 0 : i32
    %c0_i32_1 = arith.constant 0 : i32
    return %c0_i32, %c0_i32_0 : i32, i32
  }
  func.func @transform_4(%arg0: i32) -> (i32, i32) {
    %c0_i32 = arith.constant 0 : i32
    %c0_i32_0 = arith.constant 0 : i32
    %c0_i32_1 = arith.constant 0 : i32
    return %c0_i32, %c0_i32_0 : i32, i32
  }
  func.func @transform_5(%arg0: i32) -> (i32, i32) {
    %c0_i32 = arith.constant 0 : i32
    %c0_i32_0 = arith.constant 0 : i32
    %c0_i32_1 = arith.constant 0 : i32
    return %c0_i32, %c0_i32_0 : i32, i32
  }
  func.func @transform_6(%arg0: i32) -> (i32, i32) {
    %c0_i32 = arith.constant 0 : i32
    %c0_i32_0 = arith.constant 0 : i32
    %c0_i32_1 = arith.constant 0 : i32
    return %c0_i32, %c0_i32_0 : i32, i32
  }
  func.func @transform_7(%arg0: i32) -> (i32, i32) {
    %c0_i32 = arith.constant 0 : i32
    %c0_i32_0 = arith.constant 0 : i32
    %c0_i32_1 = arith.constant 0 : i32
    return %c0_i32, %c0_i32_0 : i32, i32
  }
  func.func @transform_8(%arg0: i32) -> (i32, i32) {
    %c0_i32 = arith.constant 0 : i32
    %c0_i32_0 = arith.constant 0 : i32
    %c0_i32_1 = arith.constant 0 : i32
    return %c0_i32, %c0_i32_0 : i32, i32
  }
  func.func @transform_9(%arg0: i32) -> (i32, i32) {
    %c0_i32 = arith.constant 0 : i32
    %c0_i32_0 = arith.constant 0 : i32
    return %arg0, %c0_i32 : i32, i32
  }
}

</mosaic_0001>

<llo_original>
// kernel: tpu_custom_call.1
$region0: #{tpu_custom_call.1}
  #allocation0 [shape = 'u32[]', space=smem, size = 0x4, offset = 0x4, fixed_abs, tag = 'smem constant byte address 0x4 - core index']
  #allocation1 [shape = 'u32[144,128]{1,0:T(1,128)}', space=vmem, size = 0x12000, scoped, tag = 'internal scratch']
  %s0 = inlined_call_operand.vmem [shape: f32[1024,9], index: 0, kind: input, shape index: {}]
  %s1 = inlined_call_operand.vmem [shape: f32[1024,32], index: 1, kind: input, shape index: {}]
  %s2 = inlined_call_operand.vmem [shape: f32[9,64], index: 2, kind: input, shape index: {}]
  %s3 = inlined_call_operand.vmem [shape: f32[32,64], index: 3, kind: input, shape index: {}]
  %s4 = inlined_call_operand.vmem [shape: f32[1,64], index: 4, kind: input, shape index: {}]
  %s5 = inlined_call_operand.vmem [shape: f32[64,64], index: 5, kind: input, shape index: {}]
  %s6 = inlined_call_operand.vmem [shape: f32[1,64], index: 6, kind: input, shape index: {}]
  %s7 = inlined_call_operand.vmem [shape: f32[64,3], index: 7, kind: input, shape index: {}]
  %s8 = inlined_call_operand.vmem [shape: f32[1,3], index: 8, kind: input, shape index: {}]
  %s9 = inlined_call_operand.vmem [shape: f32[1024,3], index: 9, kind: output, shape index: {}]
  %s10 = sld [smem:[#allocation0]]
  $region69: #{tpu_custom_call.1} parent=0
    _
  %s12 = ssub.s32 1, %s10
  %s13 = scalar_select 0, %s12, %s10
  loop: start=0, step=1, limit=6
  $region2: #{tpu_custom_call.1} parent=0 // loop_pre_header
    _
  $region3: #{tpu_custom_call.1} parent=0 // loop_header
    %s15 = sphi 0, %s19
    %p16 = scmp.ge.s32.totalorder %s15, 6
    %s25 = sphi 0, %s27
    %s28 = sphi 0, %s25
    %s29 = sphi 0, %s28
    %s45 = sphi 0, %s29
    %s51 = sphi 0, %s53
    %s54 = sphi 0, %s51
    %s55 = sphi 0, %s54
    %s71 = sphi 0, %s55
    %s75 = sphi 0, %s75
    %s77 = sphi 0, %s75
    %s78 = sphi 0, %s77
    %s92 = sphi 0, %s78
    %s96 = sphi 0, %s96
    %s98 = sphi 0, %s96
    %s99 = sphi 0, %s98
    %s113 = sphi 0, %s99
    %s117 = sphi 0, %s117
    %s119 = sphi 0, %s117
    %s120 = sphi 0, %s119
    %s134 = sphi 0, %s120
    %s138 = sphi 0, %s138
    %s140 = sphi 0, %s138
    %s141 = sphi 0, %s140
    %s155 = sphi 0, %s141
    %s159 = sphi 0, %s159
    %s161 = sphi 0, %s159
    %s162 = sphi 0, %s161
    %s176 = sphi 0, %s162
    %s180 = sphi 0, %s180
    %s182 = sphi 0, %s180
    %s183 = sphi 0, %s182
    %s197 = sphi 0, %s183
    %s201 = sphi 0, %s201
    %s203 = sphi 0, %s201
    %s204 = sphi 0, %s203
    %s218 = sphi 0, %s204
    %s224 = sphi 0, %s226
    %s227 = sphi 0, %s224
    %s228 = sphi 0, %s227
    %s244 = sphi 0, %s228
  $region4: #{tpu_custom_call.1} parent=0 // loop_header_branch
    %18 = sbr.rel (%p16) target = $region8
  $region5: #{tpu_custom_call.1} parent=0 // loop_body
    %s20 = ssub.s32 %s15, 1
    %s21 = ssub.s32 %s15, 2
    %s22 = sadd.s32 %s15, 1
    %s23 = ssub.s32 %s15, %s22
    %p24 = scmp.eq.s32.totalorder %s23, 0
    %s26 = sadd.s32 %s25, 1
    %s27 = scalar_select %p24, %s25, %s26
    %p30 = pneg %p24
    %p31 = scmp.eq.s32.totalorder %s15, 3
    %p32 = por %p30, %p31
    %p33 = scmp.ne.s32.totalorder %s25, %s28
    %p34 = scmp.eq.s32.totalorder %s15, 0
    %p35 = por %p33, %p34
    %p36 = scmp.ne.s32.totalorder %s25, %s28
    %p37 = scmp.eq.s32.totalorder %s20, 3
    %p38 = por %p36, %p37
    %p39 = scmp.ne.s32.totalorder %s28, %s29
    %p40 = scmp.eq.s32.totalorder %s20, 0
    %p41 = por %p39, %p40
    %p42 = scmp.ne.s32.totalorder %s28, %s29
    %p43 = scmp.eq.s32.totalorder %s21, 3
    %p44 = por %p42, %p43
    %p46 = scmp.ne.s32.totalorder %s29, %s45
    %p47 = scmp.eq.s32.totalorder %s21, 0
    %p48 = por %p46, %p47
    %s49 = ssub.s32 %s15, %s22
    %p50 = scmp.eq.s32.totalorder %s49, 0
    %s52 = sadd.s32 %s51, 1
    %s53 = scalar_select %p50, %s51, %s52
    %p56 = pneg %p50
    %p57 = scmp.eq.s32.totalorder %s15, 3
    %p58 = por %p56, %p57
    %p59 = scmp.ne.s32.totalorder %s51, %s54
    %p60 = scmp.eq.s32.totalorder %s15, 0
    %p61 = por %p59, %p60
    %p62 = scmp.ne.s32.totalorder %s51, %s54
    %p63 = scmp.eq.s32.totalorder %s20, 3
    %p64 = por %p62, %p63
    %p65 = scmp.ne.s32.totalorder %s54, %s55
    %p66 = scmp.eq.s32.totalorder %s20, 0
    %p67 = por %p65, %p66
    %p68 = scmp.ne.s32.totalorder %s54, %s55
    %p69 = scmp.eq.s32.totalorder %s21, 3
    %p70 = por %p68, %p69
    %p72 = scmp.ne.s32.totalorder %s55, %s71
    %p73 = scmp.eq.s32.totalorder %s21, 0
    %p74 = por %p72, %p73
    %s76 = sadd.s32 %s75, 1
    %p79 = scmp.eq.s32.totalorder %s15, 3
    %p80 = scmp.ne.s32.totalorder %s75, %s77
    %p81 = scmp.eq.s32.totalorder %s15, 0
    %p82 = por %p80, %p81
    %p83 = scmp.ne.s32.totalorder %s75, %s77
    %p84 = scmp.eq.s32.totalorder %s20, 3
    %p85 = por %p83, %p84
    %p86 = scmp.ne.s32.totalorder %s77, %s78
    %p87 = scmp.eq.s32.totalorder %s20, 0
    %p88 = por %p86, %p87
    %p89 = scmp.ne.s32.totalorder %s77, %s78
    %p90 = scmp.eq.s32.totalorder %s21, 3
    %p91 = por %p89, %p90
    %p93 = scmp.ne.s32.totalorder %s78, %s92
    %p94 = scmp.eq.s32.totalorder %s21, 0
    %p95 = por %p93, %p94
    %s97 = sadd.s32 %s96, 1
    %p100 = scmp.eq.s32.totalorder %s15, 3
    %p101 = scmp.ne.s32.totalorder %s96, %s98
    %p102 = scmp.eq.s32.totalorder %s15, 0
    %p103 = por %p101, %p102
    %p104 = scmp.ne.s32.totalorder %s96, %s98
    %p105 = scmp.eq.s32.totalorder %s20, 3
    %p106 = por %p104, %p105
    %p107 = scmp.ne.s32.totalorder %s98, %s99
    %p108 = scmp.eq.s32.totalorder %s20, 0
    %p109 = por %p107, %p108
    %p110 = scmp.ne.s32.totalorder %s98, %s99
    %p111 = scmp.eq.s32.totalorder %s21, 3
    %p112 = por %p110, %p111
    %p114 = scmp.ne.s32.totalorder %s99, %s113
    %p115 = scmp.eq.s32.totalorder %s21, 0
    %p116 = por %p114, %p115
    %s118 = sadd.s32 %s117, 1
    %p121 = scmp.eq.s32.totalorder %s15, 3
    %p122 = scmp.ne.s32.totalorder %s117, %s119
    %p123 = scmp.eq.s32.totalorder %s15, 0
    %p124 = por %p122, %p123
    %p125 = scmp.ne.s32.totalorder %s117, %s119
    %p126 = scmp.eq.s32.totalorder %s20, 3
    %p127 = por %p125, %p126
    %p128 = scmp.ne.s32.totalorder %s119, %s120
    %p129 = scmp.eq.s32.totalorder %s20, 0
    %p130 = por %p128, %p129
    %p131 = scmp.ne.s32.totalorder %s119, %s120
    %p132 = scmp.eq.s32.totalorder %s21, 3
    %p133 = por %p131, %p132
    %p135 = scmp.ne.s32.totalorder %s120, %s134
    %p136 = scmp.eq.s32.totalorder %s21, 0
    %p137 = por %p135, %p136
    %s139 = sadd.s32 %s138, 1
    %p142 = scmp.eq.s32.totalorder %s15, 3
    %p143 = scmp.ne.s32.totalorder %s138, %s140
    %p144 = scmp.eq.s32.totalorder %s15, 0
    %p145 = por %p143, %p144
    %p146 = scmp.ne.s32.totalorder %s138, %s140
    %p147 = scmp.eq.s32.totalorder %s20, 3
    %p148 = por %p146, %p147
    %p149 = scmp.ne.s32.totalorder %s140, %s141
    %p150 = scmp.eq.s32.totalorder %s20, 0
    %p151 = por %p149, %p150
    %p152 = scmp.ne.s32.totalorder %s140, %s141
    %p153 = scmp.eq.s32.totalorder %s21, 3
    %p154 = por %p152, %p153
    %p156 = scmp.ne.s32.totalorder %s141, %s155
    %p157 = scmp.eq.s32.totalorder %s21, 0
    %p158 = por %p156, %p157
    %s160 = sadd.s32 %s159, 1
    %p163 = scmp.eq.s32.totalorder %s15, 3
    %p164 = scmp.ne.s32.totalorder %s159, %s161
    %p165 = scmp.eq.s32.totalorder %s15, 0
    %p166 = por %p164, %p165
    %p167 = scmp.ne.s32.totalorder %s159, %s161
    %p168 = scmp.eq.s32.totalorder %s20, 3
    %p169 = por %p167, %p168
    %p170 = scmp.ne.s32.totalorder %s161, %s162
    %p171 = scmp.eq.s32.totalorder %s20, 0
    %p172 = por %p170, %p171
    %p173 = scmp.ne.s32.totalorder %s161, %s162
    %p174 = scmp.eq.s32.totalorder %s21, 3
    %p175 = por %p173, %p174
    %p177 = scmp.ne.s32.totalorder %s162, %s176
    %p178 = scmp.eq.s32.totalorder %s21, 0
    %p179 = por %p177, %p178
    %s181 = sadd.s32 %s180, 1
    %p184 = scmp.eq.s32.totalorder %s15, 3
    %p185 = scmp.ne.s32.totalorder %s180, %s182
    %p186 = scmp.eq.s32.totalorder %s15, 0
    %p187 = por %p185, %p186
    %p188 = scmp.ne.s32.totalorder %s180, %s182
    %p189 = scmp.eq.s32.totalorder %s20, 3
    %p190 = por %p188, %p189
    %p191 = scmp.ne.s32.totalorder %s182, %s183
    %p192 = scmp.eq.s32.totalorder %s20, 0
    %p193 = por %p191, %p192
    %p194 = scmp.ne.s32.totalorder %s182, %s183
    %p195 = scmp.eq.s32.totalorder %s21, 3
    %p196 = por %p194, %p195
    %p198 = scmp.ne.s32.totalorder %s183, %s197
    %p199 = scmp.eq.s32.totalorder %s21, 0
    %p200 = por %p198, %p199
    %s202 = sadd.s32 %s201, 1
    %p205 = scmp.eq.s32.totalorder %s15, 3
    %p206 = scmp.ne.s32.totalorder %s201, %s203
    %p207 = scmp.eq.s32.totalorder %s15, 0
    %p208 = por %p206, %p207
    %p209 = scmp.ne.s32.totalorder %s201, %s203
    %p210 = scmp.eq.s32.totalorder %s20, 3
    %p211 = por %p209, %p210
    %p212 = scmp.ne.s32.totalorder %s203, %s204
    %p213 = scmp.eq.s32.totalorder %s20, 0
    %p214 = por %p212, %p213
    %p215 = scmp.ne.s32.totalorder %s203, %s204
    %p216 = scmp.eq.s32.totalorder %s21, 3
    %p217 = por %p215, %p216
    %p219 = scmp.ne.s32.totalorder %s204, %s218
    %p220 = scmp.eq.s32.totalorder %s21, 0
    %p221 = por %p219, %p220
    %s222 = ssub.s32 %s15, %s22
    %p223 = scmp.eq.s32.totalorder %s222, 0
    %s225 = sadd.s32 %s224, 1
    %s226 = scalar_select %p223, %s224, %s225
    %p229 = pneg %p223
    %p230 = scmp.eq.s32.totalorder %s15, 3
    %p231 = por %p229, %p230
    %p232 = scmp.ne.s32.totalorder %s224, %s227
    %p233 = scmp.eq.s32.totalorder %s15, 0
    %p234 = por %p232, %p233
    %p235 = scmp.ne.s32.totalorder %s224, %s227
    %p236 = scmp.eq.s32.totalorder %s20, 3
    %p237 = por %p235, %p236
    %p238 = scmp.ne.s32.totalorder %s227, %s228
    %p239 = scmp.eq.s32.totalorder %s20, 0
    %p240 = por %p238, %p239
    %p241 = scmp.ne.s32.totalorder %s227, %s228
    %p242 = scmp.eq.s32.totalorder %s21, 3
    %p243 = por %p241, %p242
    %p245 = scmp.ne.s32.totalorder %s228, %s244
    %p246 = scmp.eq.s32.totalorder %s21, 0
    %p247 = por %p245, %p246
    %p248 = scmp.le.s32.totalorder 1, %s15
    %p249 = scmp.lt.s32.totalorder %s15, 5
    %p250 = pnand %p248, %p249
    %p251 = pneg %p250
    // Predicated region
    $region9: #{tpu_custom_call.1} parent=5 // pred_check
      _
    $region10: #{tpu_custom_call.1} parent=5 // pred_check_branch
      %253 = sbr.rel (%p250) target = $region12
    $region11: #{tpu_custom_call.1} parent=5 // pred_region
      %s254 = ssub.s32 %s15, 1
      // Predicated region
      $region13: #{tpu_custom_call.1} parent=11 // pred_check
        %p255 = pneg %p88
      $region14: #{tpu_custom_call.1} parent=11 // pred_check_branch
        %257 = sbr.rel (%p255) target = $region16
      $region15: #{tpu_custom_call.1} parent=11 // pred_region
        _
      $region16: #{tpu_custom_call.1} parent=11 // pred_fallthru
        _
      // Predicated region
      $region17: #{tpu_custom_call.1} parent=11 // pred_check
        %p258 = pneg %p109
      $region18: #{tpu_custom_call.1} parent=11 // pred_check_branch
        %260 = sbr.rel (%p258) target = $region20
      $region19: #{tpu_custom_call.1} parent=11 // pred_region
        _
      $region20: #{tpu_custom_call.1} parent=11 // pred_fallthru
        _
      // Predicated region
      $region21: #{tpu_custom_call.1} parent=11 // pred_check
        %p261 = pneg %p130
      $region22: #{tpu_custom_call.1} parent=11 // pred_check_branch
        %263 = sbr.rel (%p261) target = $region24
      $region23: #{tpu_custom_call.1} parent=11 // pred_region
        _
      $region24: #{tpu_custom_call.1} parent=11 // pred_fallthru
        _
      // Predicated region
      $region25: #{tpu_custom_call.1} parent=11 // pred_check
        %p264 = pneg %p151
      $region26: #{tpu_custom_call.1} parent=11 // pred_check_branch
        %266 = sbr.rel (%p264) target = $region28
      $region27: #{tpu_custom_call.1} parent=11 // pred_region
        _
      $region28: #{tpu_custom_call.1} parent=11 // pred_fallthru
        _
      // Predicated region
      $region29: #{tpu_custom_call.1} parent=11 // pred_check
        %p267 = pneg %p172
      $region30: #{tpu_custom_call.1} parent=11 // pred_check_branch
        %269 = sbr.rel (%p267) target = $region32
      $region31: #{tpu_custom_call.1} parent=11 // pred_region
        _
      $region32: #{tpu_custom_call.1} parent=11 // pred_fallthru
        _
      // Predicated region
      $region33: #{tpu_custom_call.1} parent=11 // pred_check
        %p270 = pneg %p193
      $region34: #{tpu_custom_call.1} parent=11 // pred_check_branch
        %272 = sbr.rel (%p270) target = $region36
      $region35: #{tpu_custom_call.1} parent=11 // pred_region
        _
      $region36: #{tpu_custom_call.1} parent=11 // pred_fallthru
        _
      // Predicated region
      $region37: #{tpu_custom_call.1} parent=11 // pred_check
        %p273 = pneg %p214
      $region38: #{tpu_custom_call.1} parent=11 // pred_check_branch
        %275 = sbr.rel (%p273) target = $region40
      $region39: #{tpu_custom_call.1} parent=11 // pred_region
        _
      $region40: #{tpu_custom_call.1} parent=11 // pred_fallthru
        _
    $region12: #{tpu_custom_call.1} parent=5 // pred_fallthru
      _
    %p276 = scmp.lt.s32.totalorder %s15, 4
    // Predicated region
    $region41: #{tpu_custom_call.1} parent=5 // pred_check
      %p277 = pneg %p276
    $region42: #{tpu_custom_call.1} parent=5 // pred_check_branch
      %279 = sbr.rel (%p277) target = $region44
    $region43: #{tpu_custom_call.1} parent=5 // pred_region
      // Predicated region
      $region45: #{tpu_custom_call.1} parent=43 // pred_check
        %p280 = pneg %p35
      $region46: #{tpu_custom_call.1} parent=43 // pred_check_branch
        %282 = sbr.rel (%p280) target = $region48
      $region47: #{tpu_custom_call.1} parent=43 // pred_region
        %s283 = smul.u32 32, %s15
        %p284 = scmp.lt.s32.totalorder %s283, 127
        %s285 = scalar_select %p284, %s283, 127
        %s286 = smul.addr %s285, 8
        %s287 = scalar_lea.vmem %s0, %s286
        %s288 = smul.u32 32, %s15
      $region48: #{tpu_custom_call.1} parent=43 // pred_fallthru
        _
      // Predicated region
      $region49: #{tpu_custom_call.1} parent=43 // pred_check
        %p289 = pneg %p61
      $region50: #{tpu_custom_call.1} parent=43 // pred_check_branch
        %291 = sbr.rel (%p289) target = $region52
      $region51: #{tpu_custom_call.1} parent=43 // pred_region
        %s292 = smul.u32 32, %s15
        %p293 = scmp.lt.s32.totalorder %s292, 127
        %s294 = scalar_select %p293, %s292, 127
        %s295 = smul.addr %s294, 8
        %s296 = scalar_lea.vmem %s1, %s295
        %s297 = smul.u32 32, %s15
      $region52: #{tpu_custom_call.1} parent=43 // pred_fallthru
        _
    $region44: #{tpu_custom_call.1} parent=5 // pred_fallthru
      _
    %p298 = scmp.le.s32.totalorder 1, %s15
    %p299 = scmp.lt.s32.totalorder %s15, 5
    %p300 = pnand %p298, %p299
    %p301 = pneg %p300
    // Predicated region
    $region53: #{tpu_custom_call.1} parent=5 // pred_check
      _
    $region54: #{tpu_custom_call.1} parent=5 // pred_check_branch
      %303 = sbr.rel (%p300) target = $region56
    $region55: #{tpu_custom_call.1} parent=5 // pred_region
      %s304 = ssub.s32 %s15, 1
      %s305 = smul.u32 32, %s20
      %p306 = scmp.lt.s32.totalorder %s305, 127
      %s307 = scalar_select %p306, %s305, 127
      %s308 = smul.addr %s307, 8
      %s309 = scalar_lea.vmem %s0, %s308
      %p310 = pneg %p41
      %p311 = pneg %p38
      %s312 = smul.u32 32, %s20
      %p313 = scmp.lt.s32.totalorder %s312, 127
      %s314 = scalar_select %p313, %s312, 127
      %s315 = smul.addr %s314, 8
      %s316 = scalar_lea.vmem %s1, %s315
      %p317 = pneg %p67
      %p318 = pneg %p64
      %p319 = pneg %p88
      %p320 = pneg %p85
      %p321 = pneg %p109
      %p322 = pneg %p106
      %p323 = pneg %p130
      %p324 = pneg %p127
      %p325 = pneg %p151
      %p326 = pneg %p148
      %p327 = pneg %p172
      %p328 = pneg %p169
      %p329 = pneg %p193
      %p330 = pneg %p190
      %p331 = pneg %p214
      %p332 = pneg %p211
      %p333 = pneg %p240
      %p334 = pneg %p237
      %s335 = smul.u32 32, %s20
      %p336 = scmp.lt.s32.totalorder %s335, 127
      %s337 = scalar_select %p336, %s335, 127
      %s338 = smul.addr %s337, 8
      %s339 = scalar_lea.vmem %s9, %s338
      %s340 = smul.u32 32, %s20
      %p341 = scmp.lt.s32.totalorder %s340, 127
      %s342 = scalar_select %p341, %s340, 127
      %s343 = smul.addr %s342, 8
      %s344 = scalar_lea.vmem %s0, %s343
      %s345 = smul.u32 32, %s20
      %s346 = smul.u32 32, %s20
      %p347 = scmp.lt.s32.totalorder %s346, 127
      %s348 = scalar_select %p347, %s346, 127
      %s349 = smul.addr %s348, 8
      %s350 = scalar_lea.vmem %s1, %s349
      %s351 = smul.u32 32, %s20
      %s352 = smul.u32 32, %s20
      %p353 = scmp.lt.s32.totalorder %s352, 127
      %s354 = scalar_select %p353, %s352, 127
      %s355 = smul.addr %s354, 8
      %s356 = scalar_lea.vmem %s9, %s355
      %s357 = smul.u32 32, %s20
      %v358 = vld [vmem:[%s344] sm:$0xff]
      %v359 = vld [vmem:[%s344 + $0x8] sm:$0xff]
      %v360 = vld [vmem:[%s344 + $0x10] sm:$0xff]
      %v361 = vld [vmem:[%s344 + $0x18] sm:$0xff]
      %v362 = vld [vmem:[%s344 + $0x20] sm:$0xff]
      %v363 = vld [vmem:[%s344 + $0x28] sm:$0xff]
      %v364 = vld [vmem:[%s344 + $0x30] sm:$0xff]
      %v365 = vld [vmem:[%s344 + $0x38] sm:$0xff]
      %v366 = vld [vmem:[%s344 + $0x40] sm:$0xff]
      %v367 = vld [vmem:[%s344 + $0x48] sm:$0xff]
      %v368 = vld [vmem:[%s344 + $0x50] sm:$0xff]
      %v369 = vld [vmem:[%s344 + $0x58] sm:$0xff]
      %v370 = vld [vmem:[%s344 + $0x60] sm:$0xff]
      %v371 = vld [vmem:[%s344 + $0x68] sm:$0xff]
      %v372 = vld [vmem:[%s344 + $0x70] sm:$0xff]
      %v373 = vld [vmem:[%s344 + $0x78] sm:$0xff]
      %v374 = vld [vmem:[%s344 + $0x80] sm:$0xff]
      %v375 = vld [vmem:[%s344 + $0x88] sm:$0xff]
      %v376 = vld [vmem:[%s344 + $0x90] sm:$0xff]
      %v377 = vld [vmem:[%s344 + $0x98] sm:$0xff]
      %v378 = vld [vmem:[%s344 + $0xa0] sm:$0xff]
      %v379 = vld [vmem:[%s344 + $0xa8] sm:$0xff]
      %v380 = vld [vmem:[%s344 + $0xb0] sm:$0xff]
      %v381 = vld [vmem:[%s344 + $0xb8] sm:$0xff]
      %v382 = vld [vmem:[%s344 + $0xc0] sm:$0xff]
      %v383 = vld [vmem:[%s344 + $0xc8] sm:$0xff]
      %v384 = vld [vmem:[%s344 + $0xd0] sm:$0xff]
      %v385 = vld [vmem:[%s344 + $0xd8] sm:$0xff]
      %v386 = vld [vmem:[%s344 + $0xe0] sm:$0xff]
      %v387 = vld [vmem:[%s344 + $0xe8] sm:$0xff]
      %v388 = vld [vmem:[%s344 + $0xf0] sm:$0xff]
      %v389 = vld [vmem:[%s344 + $0xf8] sm:$0xff]
      %v390 = vld [vmem:[%s2] sm:$0xff]
      %v391 = vld [vmem:[%s2 + $0x8] sm:$0x1]
      %v392 = vld [vmem:[%s350] sm:$0xff]
      %v393 = vld [vmem:[%s350 + $0x8] sm:$0xff]
      %v394 = vld [vmem:[%s350 + $0x10] sm:$0xff]
      %v395 = vld [vmem:[%s350 + $0x18] sm:$0xff]
      %v396 = vld [vmem:[%s350 + $0x20] sm:$0xff]
      %v397 = vld [vmem:[%s350 + $0x28] sm:$0xff]
      %v398 = vld [vmem:[%s350 + $0x30] sm:$0xff]
      %v399 = vld [vmem:[%s350 + $0x38] sm:$0xff]
      %v400 = vld [vmem:[%s350 + $0x40] sm:$0xff]
      %v401 = vld [vmem:[%s350 + $0x48] sm:$0xff]
      %v402 = vld [vmem:[%s350 + $0x50] sm:$0xff]
      %v403 = vld [vmem:[%s350 + $0x58] sm:$0xff]
      %v404 = vld [vmem:[%s350 + $0x60] sm:$0xff]
      %v405 = vld [vmem:[%s350 + $0x68] sm:$0xff]
      %v406 = vld [vmem:[%s350 + $0x70] sm:$0xff]
      %v407 = vld [vmem:[%s350 + $0x78] sm:$0xff]
      %v408 = vld [vmem:[%s350 + $0x80] sm:$0xff]
      %v409 = vld [vmem:[%s350 + $0x88] sm:$0xff]
      %v410 = vld [vmem:[%s350 + $0x90] sm:$0xff]
      %v411 = vld [vmem:[%s350 + $0x98] sm:$0xff]
      %v412 = vld [vmem:[%s350 + $0xa0] sm:$0xff]
      %v413 = vld [vmem:[%s350 + $0xa8] sm:$0xff]
      %v414 = vld [vmem:[%s350 + $0xb0] sm:$0xff]
      %v415 = vld [vmem:[%s350 + $0xb8] sm:$0xff]
      %v416 = vld [vmem:[%s350 + $0xc0] sm:$0xff]
      %v417 = vld [vmem:[%s350 + $0xc8] sm:$0xff]
      %v418 = vld [vmem:[%s350 + $0xd0] sm:$0xff]
      %v419 = vld [vmem:[%s350 + $0xd8] sm:$0xff]
      %v420 = vld [vmem:[%s350 + $0xe0] sm:$0xff]
      %v421 = vld [vmem:[%s350 + $0xe8] sm:$0xff]
      %v422 = vld [vmem:[%s350 + $0xf0] sm:$0xff]
      %v423 = vld [vmem:[%s350 + $0xf8] sm:$0xff]
      %v424 = vld [vmem:[%s3] sm:$0xff]
      %v425 = vld [vmem:[%s3 + $0x8] sm:$0xff]
      %v426 = vld [vmem:[%s3 + $0x10] sm:$0xff]
      %v427 = vld [vmem:[%s3 + $0x18] sm:$0xff]
      %vm428 = vcmask 261120
      %v430 = vsel %vm428, %v392, 0
      %v433 = vsel %vm428, %v393, 0
      %v436 = vsel %vm428, %v394, 0
      %v439 = vsel %vm428, %v395, 0
      %v442 = vsel %vm428, %v396, 0
      %v445 = vsel %vm428, %v397, 0
      %v448 = vsel %vm428, %v398, 0
      %v451 = vsel %vm428, %v399, 0
      %v454 = vsel %vm428, %v400, 0
      %v457 = vsel %vm428, %v401, 0
      %v460 = vsel %vm428, %v402, 0
      %v463 = vsel %vm428, %v403, 0
      %v466 = vsel %vm428, %v404, 0
      %v469 = vsel %vm428, %v405, 0
      %v472 = vsel %vm428, %v406, 0
      %v475 = vsel %vm428, %v407, 0
      %v478 = vsel %vm428, %v408, 0
      %v481 = vsel %vm428, %v409, 0
      %v484 = vsel %vm428, %v410, 0
      %v487 = vsel %vm428, %v411, 0
      %v490 = vsel %vm428, %v412, 0
      %v493 = vsel %vm428, %v413, 0
      %v496 = vsel %vm428, %v414, 0
      %v499 = vsel %vm428, %v415, 0
      %v502 = vsel %vm428, %v416, 0
      %v505 = vsel %vm428, %v417, 0
      %v508 = vsel %vm428, %v418, 0
      %v511 = vsel %vm428, %v419, 0
      %v514 = vsel %vm428, %v420, 0
      %v517 = vsel %vm428, %v421, 0
      %v520 = vsel %vm428, %v422, 0
      %v523 = vsel %vm428, %v423, 0
      %525 = vmatprep.subr.mxu0 0.0
      %526 = vmatpush1.msra.mxu0 0.0
      %527 = vmatprep.subr.mxu0 0.0
      %528 = vmatpush1.msra.mxu0 0.0
      %529 = vmatprep.subr.mxu0 0.0
      %530 = vmatpush1.msra.mxu0 0.0
      %531 = vmatprep.subr.mxu0 0.0
      %532 = vmatpush1.msra.mxu0 0.0
      %533 = vmatprep.subr.mxu0 0.0
      %534 = vmatpush1.msra.mxu0 0.0
      %535 = vmatprep.subr.mxu0 0.0
      %536 = vmatpush1.msra.mxu0 0.0
      %537 = vmatprep.subr.mxu0 0.0
      %538 = vmatpush1.msra.mxu0 0.0
      %539 = vmatprep.subr.mxu0 0.0
      %540 = vmatpush1.msra.mxu0 0.0
      %541 = vmatprep.subr.mxu0 0.0
      %542 = vmatpush1.msra.mxu0 0.0
      %543 = vmatprep.subr.mxu0 0.0
      %544 = vmatpush1.msra.mxu0 0.0
      %545 = vmatprep.subr.mxu0 0.0
      %546 = vmatpush1.msra.mxu0 0.0
      %547 = vmatprep.subr.mxu0 0.0
      %548 = vmatpush1.msra.mxu0 0.0
      %549 = vmatprep.subr.mxu0 0.0
      %550 = vmatpush1.msra.mxu0 %v427
      %551 = vmatprep.subr.mxu0 0.0
      %552 = vmatpush1.msra.mxu0 %v426
      %553 = vmatprep.subr.mxu0 0.0
      %554 = vmatpush1.msra.mxu0 %v425
      %555 = vmatprep.subr.mxu0 0.0
      %556 = vmatpush1.msra.mxu0 %v424
      %557 = vmatprep.subr.mxu0 0.0
      %558 = vmatpush2.msra.mxu0 0.0
      %559 = vmatprep.subr.mxu0 0.0
      %560 = vmatpush2.msra.mxu0 0.0
      %561 = vmatprep.subr.mxu0 0.0
      %562 = vmatpush2.msra.mxu0 0.0
      %563 = vmatprep.subr.mxu0 0.0
      %564 = vmatpush2.msra.mxu0 0.0
      %565 = vmatprep.subr.mxu0 0.0
      %566 = vmatpush2.msra.mxu0 0.0
      %567 = vmatprep.subr.mxu0 0.0
      %568 = vmatpush2.msra.mxu0 0.0
      %569 = vmatprep.subr.mxu0 0.0
      %570 = vmatpush2.msra.mxu0 0.0
      %571 = vmatprep.subr.mxu0 0.0
      %572 = vmatpush2.msra.mxu0 0.0
      %573 = vmatprep.subr.mxu0 0.0
      %574 = vmatpush2.msra.mxu0 0.0
      %575 = vmatprep.subr.mxu0 0.0
      %576 = vmatpush2.msra.mxu0 0.0
      %577 = vmatprep.subr.mxu0 0.0
      %578 = vmatpush2.msra.mxu0 0.0
      %579 = vmatprep.subr.mxu0 0.0
      %580 = vmatpush2.msra.mxu0 0.0
      %581 = vmatprep.subr.mxu0 0.0
      %582 = vmatpush2.msra.mxu0 0.0
      %583 = vmatprep.subr.mxu0 0.0
      %584 = vmatpush2.msra.mxu0 0.0
      %585 = vmatprep.subr.mxu0 0.0
      %586 = vmatpush2.msra.mxu0 0.0
      %587 = vmatprep.subr.mxu0 0.0
      %588 = vmatpush2.msra.mxu0 0.0
      %589 = vmatprep.mubr.f32.mxu0 0.0
      %590 = vmatmul.mubr.f32.gmra.mxu0 %v430
      %v591 = vpop.f32.mrf.mxu0
      %v592 = vadd.f32 0.0, %v591
      %v593 = vpop.f32.mrf.mxu0
      %594 = vmatprep.mubr.f32.mxu0 0.0
      %595 = vmatmul.mubr.f32.gmra.mxu0 %v433
      %v596 = vpop.f32.mrf.mxu0
      %v597 = vadd.f32 0.0, %v596
      %v598 = vpop.f32.mrf.mxu0
      %599 = vmatprep.mubr.f32.mxu0 0.0
      %600 = vmatmul.mubr.f32.gmra.mxu0 %v436
      %v601 = vpop.f32.mrf.mxu0
      %v602 = vadd.f32 0.0, %v601
      %v603 = vpop.f32.mrf.mxu0
      %604 = vmatprep.mubr.f32.mxu0 0.0
      %605 = vmatmul.mubr.f32.gmra.mxu0 %v439
      %v606 = vpop.f32.mrf.mxu0
      %v607 = vadd.f32 0.0, %v606
      %v608 = vpop.f32.mrf.mxu0
      %609 = vmatprep.mubr.f32.mxu0 0.0
      %610 = vmatmul.mubr.f32.gmra.mxu0 %v442
      %v611 = vpop.f32.mrf.mxu0
      %v612 = vadd.f32 0.0, %v611
      %v613 = vpop.f32.mrf.mxu0
      %614 = vmatprep.mubr.f32.mxu0 0.0
      %615 = vmatmul.mubr.f32.gmra.mxu0 %v445
      %v616 = vpop.f32.mrf.mxu0
      %v617 = vadd.f32 0.0, %v616
      %v618 = vpop.f32.mrf.mxu0
      %619 = vmatprep.mubr.f32.mxu0 0.0
      %620 = vmatmul.mubr.f32.gmra.mxu0 %v448
      %v621 = vpop.f32.mrf.mxu0
      %v622 = vadd.f32 0.0, %v621
      %v623 = vpop.f32.mrf.mxu0
      %624 = vmatprep.mubr.f32.mxu0 0.0
      %625 = vmatmul.mubr.f32.gmra.mxu0 %v451
      %v626 = vpop.f32.mrf.mxu0
      %v627 = vadd.f32 0.0, %v626
      %v628 = vpop.f32.mrf.mxu0
      %629 = vmatprep.mubr.f32.mxu0 0.0
      %630 = vmatmul.mubr.f32.gmra.mxu0 %v454
      %v631 = vpop.f32.mrf.mxu0
      %v632 = vadd.f32 0.0, %v631
      %v633 = vpop.f32.mrf.mxu0
      %634 = vmatprep.mubr.f32.mxu0 0.0
      %635 = vmatmul.mubr.f32.gmra.mxu0 %v457
      %v636 = vpop.f32.mrf.mxu0
      %v637 = vadd.f32 0.0, %v636
      %v638 = vpop.f32.mrf.mxu0
      %639 = vmatprep.mubr.f32.mxu0 0.0
      %640 = vmatmul.mubr.f32.gmra.mxu0 %v460
      %v641 = vpop.f32.mrf.mxu0
      %v642 = vadd.f32 0.0, %v641
      %v643 = vpop.f32.mrf.mxu0
      %644 = vmatprep.mubr.f32.mxu0 0.0
      %645 = vmatmul.mubr.f32.gmra.mxu0 %v463
      %v646 = vpop.f32.mrf.mxu0
      %v647 = vadd.f32 0.0, %v646
      %v648 = vpop.f32.mrf.mxu0
      %649 = vmatprep.mubr.f32.mxu0 0.0
      %650 = vmatmul.mubr.f32.gmra.mxu0 %v466
      %v651 = vpop.f32.mrf.mxu0
      %v652 = vadd.f32 0.0, %v651
      %v653 = vpop.f32.mrf.mxu0
      %654 = vmatprep.mubr.f32.mxu0 0.0
      %655 = vmatmul.mubr.f32.gmra.mxu0 %v469
      %v656 = vpop.f32.mrf.mxu0
      %v657 = vadd.f32 0.0, %v656
      %v658 = vpop.f32.mrf.mxu0
      %659 = vmatprep.mubr.f32.mxu0 0.0
      %660 = vmatmul.mubr.f32.gmra.mxu0 %v472
      %v661 = vpop.f32.mrf.mxu0
      %v662 = vadd.f32 0.0, %v661
      %v663 = vpop.f32.mrf.mxu0
      %664 = vmatprep.mubr.f32.mxu0 0.0
      %665 = vmatmul.mubr.f32.gmra.mxu0 %v475
      %v666 = vpop.f32.mrf.mxu0
      %v667 = vadd.f32 0.0, %v666
      %v668 = vpop.f32.mrf.mxu0
      %669 = vmatprep.mubr.f32.mxu0 0.0
      %670 = vmatmul.mubr.f32.gmra.mxu0 %v478
      %v671 = vpop.f32.mrf.mxu0
      %v672 = vadd.f32 0.0, %v671
      %v673 = vpop.f32.mrf.mxu0
      %674 = vmatprep.mubr.f32.mxu0 0.0
      %675 = vmatmul.mubr.f32.gmra.mxu0 %v481
      %v676 = vpop.f32.mrf.mxu0
      %v677 = vadd.f32 0.0, %v676
      %v678 = vpop.f32.mrf.mxu0
      %679 = vmatprep.mubr.f32.mxu0 0.0
      %680 = vmatmul.mubr.f32.gmra.mxu0 %v484
      %v681 = vpop.f32.mrf.mxu0
      %v682 = vadd.f32 0.0, %v681
      %v683 = vpop.f32.mrf.mxu0
      %684 = vmatprep.mubr.f32.mxu0 0.0
      %685 = vmatmul.mubr.f32.gmra.mxu0 %v487
      %v686 = vpop.f32.mrf.mxu0
      %v687 = vadd.f32 0.0, %v686
      %v688 = vpop.f32.mrf.mxu0
      %689 = vmatprep.mubr.f32.mxu0 0.0
      %690 = vmatmul.mubr.f32.gmra.mxu0 %v490
      %v691 = vpop.f32.mrf.mxu0
      %v692 = vadd.f32 0.0, %v691
      %v693 = vpop.f32.mrf.mxu0
      %694 = vmatprep.mubr.f32.mxu0 0.0
      %695 = vmatmul.mubr.f32.gmra.mxu0 %v493
      %v696 = vpop.f32.mrf.mxu0
      %v697 = vadd.f32 0.0, %v696
      %v698 = vpop.f32.mrf.mxu0
      %699 = vmatprep.mubr.f32.mxu0 0.0
      %700 = vmatmul.mubr.f32.gmra.mxu0 %v496
      %v701 = vpop.f32.mrf.mxu0
      %v702 = vadd.f32 0.0, %v701
      %v703 = vpop.f32.mrf.mxu0
      %704 = vmatprep.mubr.f32.mxu0 0.0
      %705 = vmatmul.mubr.f32.gmra.mxu0 %v499
      %v706 = vpop.f32.mrf.mxu0
      %v707 = vadd.f32 0.0, %v706
      %v708 = vpop.f32.mrf.mxu0
      %709 = vmatprep.mubr.f32.mxu0 0.0
      %710 = vmatmul.mubr.f32.gmra.mxu0 %v502
      %v711 = vpop.f32.mrf.mxu0
      %v712 = vadd.f32 0.0, %v711
      %v713 = vpop.f32.mrf.mxu0
      %714 = vmatprep.mubr.f32.mxu0 0.0
      %715 = vmatmul.mubr.f32.gmra.mxu0 %v505
      %v716 = vpop.f32.mrf.mxu0
      %v717 = vadd.f32 0.0, %v716
      %v718 = vpop.f32.mrf.mxu0
      %719 = vmatprep.mubr.f32.mxu0 0.0
      %720 = vmatmul.mubr.f32.gmra.mxu0 %v508
      %v721 = vpop.f32.mrf.mxu0
      %v722 = vadd.f32 0.0, %v721
      %v723 = vpop.f32.mrf.mxu0
      %724 = vmatprep.mubr.f32.mxu0 0.0
      %725 = vmatmul.mubr.f32.gmra.mxu0 %v511
      %v726 = vpop.f32.mrf.mxu0
      %v727 = vadd.f32 0.0, %v726
      %v728 = vpop.f32.mrf.mxu0
      %729 = vmatprep.mubr.f32.mxu0 0.0
      %730 = vmatmul.mubr.f32.gmra.mxu0 %v514
      %v731 = vpop.f32.mrf.mxu0
      %v732 = vadd.f32 0.0, %v731
      %v733 = vpop.f32.mrf.mxu0
      %734 = vmatprep.mubr.f32.mxu0 0.0
      %735 = vmatmul.mubr.f32.gmra.mxu0 %v517
      %v736 = vpop.f32.mrf.mxu0
      %v737 = vadd.f32 0.0, %v736
      %v738 = vpop.f32.mrf.mxu0
      %739 = vmatprep.mubr.f32.mxu0 0.0
      %740 = vmatmul.mubr.f32.gmra.mxu0 %v520
      %v741 = vpop.f32.mrf.mxu0
      %v742 = vadd.f32 0.0, %v741
      %v743 = vpop.f32.mrf.mxu0
      %744 = vmatprep.mubr.f32.mxu0 0.0
      %745 = vmatmul.mubr.f32.gmra.mxu0 %v523
      %v746 = vpop.f32.mrf.mxu0
      %v747 = vadd.f32 0.0, %v746
      %v748 = vpop.f32.mrf.mxu0
      %749 = vdwg.mxu0
      %vm750 = vcmask 72704
      %v752 = vsel %vm750, %v358, 0
      %v755 = vsel %vm750, %v359, 0
      %v758 = vsel %vm750, %v360, 0
      %v761 = vsel %vm750, %v361, 0
      %v764 = vsel %vm750, %v362, 0
      %v767 = vsel %vm750, %v363, 0
      %v770 = vsel %vm750, %v364, 0
      %v773 = vsel %vm750, %v365, 0
      %v776 = vsel %vm750, %v366, 0
      %v779 = vsel %vm750, %v367, 0
      %v782 = vsel %vm750, %v368, 0
      %v785 = vsel %vm750, %v369, 0
      %v788 = vsel %vm750, %v370, 0
      %v791 = vsel %vm750, %v371, 0
      %v794 = vsel %vm750, %v372, 0
      %v797 = vsel %vm750, %v373, 0
      %v800 = vsel %vm750, %v374, 0
      %v803 = vsel %vm750, %v375, 0
      %v806 = vsel %vm750, %v376, 0
      %v809 = vsel %vm750, %v377, 0
      %v812 = vsel %vm750, %v378, 0
      %v815 = vsel %vm750, %v379, 0
      %v818 = vsel %vm750, %v380, 0
      %v821 = vsel %vm750, %v381, 0
      %v824 = vsel %vm750, %v382, 0
      %v827 = vsel %vm750, %v383, 0
      %v830 = vsel %vm750, %v384, 0
      %v833 = vsel %vm750, %v385, 0
      %v836 = vsel %vm750, %v386, 0
      %v839 = vsel %vm750, %v387, 0
      %v842 = vsel %vm750, %v388, 0
      %v845 = vsel %vm750, %v389, 0
      %vm847 = vcmask 1040384
      %v849 = vsel %vm847, %v391, 0
      %851 = vmatprep.subr.mxu0 0.0
      %852 = vmatpush1.msra.mxu0 0.0
      %853 = vmatprep.subr.mxu0 0.0
      %854 = vmatpush1.msra.mxu0 0.0
      %855 = vmatprep.subr.mxu0 0.0
      %856 = vmatpush1.msra.mxu0 0.0
      %857 = vmatprep.subr.mxu0 0.0
      %858 = vmatpush1.msra.mxu0 0.0
      %859 = vmatprep.subr.mxu0 0.0
      %860 = vmatpush1.msra.mxu0 0.0
      %861 = vmatprep.subr.mxu0 0.0
      %862 = vmatpush1.msra.mxu0 0.0
      %863 = vmatprep.subr.mxu0 0.0
      %864 = vmatpush1.msra.mxu0 0.0
      %865 = vmatprep.subr.mxu0 0.0
      %866 = vmatpush1.msra.mxu0 0.0
      %867 = vmatprep.subr.mxu0 0.0
      %868 = vmatpush1.msra.mxu0 0.0
      %869 = vmatprep.subr.mxu0 0.0
      %870 = vmatpush1.msra.mxu0 0.0
      %871 = vmatprep.subr.mxu0 0.0
      %872 = vmatpush1.msra.mxu0 0.0
      %873 = vmatprep.subr.mxu0 0.0
      %874 = vmatpush1.msra.mxu0 0.0
      %875 = vmatprep.subr.mxu0 0.0
      %876 = vmatpush1.msra.mxu0 0.0
      %877 = vmatprep.subr.mxu0 0.0
      %878 = vmatpush1.msra.mxu0 0.0
      %879 = vmatprep.subr.mxu0 0.0
      %880 = vmatpush1.msra.mxu0 %v849
      %881 = vmatprep.subr.mxu0 0.0
      %882 = vmatpush1.msra.mxu0 %v390
      %883 = vmatprep.subr.mxu0 0.0
      %884 = vmatpush2.msra.mxu0 0.0
      %885 = vmatprep.subr.mxu0 0.0
      %886 = vmatpush2.msra.mxu0 0.0
      %887 = vmatprep.subr.mxu0 0.0
      %888 = vmatpush2.msra.mxu0 0.0
      %889 = vmatprep.subr.mxu0 0.0
      %890 = vmatpush2.msra.mxu0 0.0
      %891 = vmatprep.subr.mxu0 0.0
      %892 = vmatpush2.msra.mxu0 0.0
      %893 = vmatprep.subr.mxu0 0.0
      %894 = vmatpush2.msra.mxu0 0.0
      %895 = vmatprep.subr.mxu0 0.0
      %896 = vmatpush2.msra.mxu0 0.0
      %897 = vmatprep.subr.mxu0 0.0
      %898 = vmatpush2.msra.mxu0 0.0
      %899 = vmatprep.subr.mxu0 0.0
      %900 = vmatpush2.msra.mxu0 0.0
      %901 = vmatprep.subr.mxu0 0.0
      %902 = vmatpush2.msra.mxu0 0.0
      %903 = vmatprep.subr.mxu0 0.0
      %904 = vmatpush2.msra.mxu0 0.0
      %905 = vmatprep.subr.mxu0 0.0
      %906 = vmatpush2.msra.mxu0 0.0
      %907 = vmatprep.subr.mxu0 0.0
      %908 = vmatpush2.msra.mxu0 0.0
      %909 = vmatprep.subr.mxu0 0.0
      %910 = vmatpush2.msra.mxu0 0.0
      %911 = vmatprep.subr.mxu0 0.0
      %912 = vmatpush2.msra.mxu0 0.0
      %913 = vmatprep.subr.mxu0 0.0
      %914 = vmatpush2.msra.mxu0 0.0
      %915 = vmatprep.mubr.f32.mxu0 0.0
      %916 = vmatmul.mubr.f32.gmra.mxu0 %v752
      %v917 = vpop.f32.mrf.mxu0
      %v918 = vadd.f32 %v592, %v917
      %v919 = vpop.f32.mrf.mxu0
      %920 = vmatprep.mubr.f32.mxu0 0.0
      %921 = vmatmul.mubr.f32.gmra.mxu0 %v755
      %v922 = vpop.f32.mrf.mxu0
      %v923 = vadd.f32 %v597, %v922
      %v924 = vpop.f32.mrf.mxu0
      %925 = vmatprep.mubr.f32.mxu0 0.0
      %926 = vmatmul.mubr.f32.gmra.mxu0 %v758
      %v927 = vpop.f32.mrf.mxu0
      %v928 = vadd.f32 %v602, %v927
      %v929 = vpop.f32.mrf.mxu0
      %930 = vmatprep.mubr.f32.mxu0 0.0
      %931 = vmatmul.mubr.f32.gmra.mxu0 %v761
      %v932 = vpop.f32.mrf.mxu0
      %v933 = vadd.f32 %v607, %v932
      %v934 = vpop.f32.mrf.mxu0
      %935 = vmatprep.mubr.f32.mxu0 0.0
      %936 = vmatmul.mubr.f32.gmra.mxu0 %v764
      %v937 = vpop.f32.mrf.mxu0
      %v938 = vadd.f32 %v612, %v937
      %v939 = vpop.f32.mrf.mxu0
      %940 = vmatprep.mubr.f32.mxu0 0.0
      %941 = vmatmul.mubr.f32.gmra.mxu0 %v767
      %v942 = vpop.f32.mrf.mxu0
      %v943 = vadd.f32 %v617, %v942
      %v944 = vpop.f32.mrf.mxu0
      %945 = vmatprep.mubr.f32.mxu0 0.0
      %946 = vmatmul.mubr.f32.gmra.mxu0 %v770
      %v947 = vpop.f32.mrf.mxu0
      %v948 = vadd.f32 %v622, %v947
      %v949 = vpop.f32.mrf.mxu0
      %950 = vmatprep.mubr.f32.mxu0 0.0
      %951 = vmatmul.mubr.f32.gmra.mxu0 %v773
      %v952 = vpop.f32.mrf.mxu0
      %v953 = vadd.f32 %v627, %v952
      %v954 = vpop.f32.mrf.mxu0
      %955 = vmatprep.mubr.f32.mxu0 0.0
      %956 = vmatmul.mubr.f32.gmra.mxu0 %v776
      %v957 = vpop.f32.mrf.mxu0
      %v958 = vadd.f32 %v632, %v957
      %v959 = vpop.f32.mrf.mxu0
      %960 = vmatprep.mubr.f32.mxu0 0.0
      %961 = vmatmul.mubr.f32.gmra.mxu0 %v779
      %v962 = vpop.f32.mrf.mxu0
      %v963 = vadd.f32 %v637, %v962
      %v964 = vpop.f32.mrf.mxu0
      %965 = vmatprep.mubr.f32.mxu0 0.0
      %966 = vmatmul.mubr.f32.gmra.mxu0 %v782
      %v967 = vpop.f32.mrf.mxu0
      %v968 = vadd.f32 %v642, %v967
      %v969 = vpop.f32.mrf.mxu0
      %970 = vmatprep.mubr.f32.mxu0 0.0
      %971 = vmatmul.mubr.f32.gmra.mxu0 %v785
      %v972 = vpop.f32.mrf.mxu0
      %v973 = vadd.f32 %v647, %v972
      %v974 = vpop.f32.mrf.mxu0
      %975 = vmatprep.mubr.f32.mxu0 0.0
      %976 = vmatmul.mubr.f32.gmra.mxu0 %v788
      %v977 = vpop.f32.mrf.mxu0
      %v978 = vadd.f32 %v652, %v977
      %v979 = vpop.f32.mrf.mxu0
      %980 = vmatprep.mubr.f32.mxu0 0.0
      %981 = vmatmul.mubr.f32.gmra.mxu0 %v791
      %v982 = vpop.f32.mrf.mxu0
      %v983 = vadd.f32 %v657, %v982
      %v984 = vpop.f32.mrf.mxu0
      %985 = vmatprep.mubr.f32.mxu0 0.0
      %986 = vmatmul.mubr.f32.gmra.mxu0 %v794
      %v987 = vpop.f32.mrf.mxu0
      %v988 = vadd.f32 %v662, %v987
      %v989 = vpop.f32.mrf.mxu0
      %990 = vmatprep.mubr.f32.mxu0 0.0
      %991 = vmatmul.mubr.f32.gmra.mxu0 %v797
      %v992 = vpop.f32.mrf.mxu0
      %v993 = vadd.f32 %v667, %v992
      %v994 = vpop.f32.mrf.mxu0
      %995 = vmatprep.mubr.f32.mxu0 0.0
      %996 = vmatmul.mubr.f32.gmra.mxu0 %v800
      %v997 = vpop.f32.mrf.mxu0
      %v998 = vadd.f32 %v672, %v997
      %v999 = vpop.f32.mrf.mxu0
      %1000 = vmatprep.mubr.f32.mxu0 0.0
      %1001 = vmatmul.mubr.f32.gmra.mxu0 %v803
      %v1002 = vpop.f32.mrf.mxu0
      %v1003 = vadd.f32 %v677, %v1002
      %v1004 = vpop.f32.mrf.mxu0
      %1005 = vmatprep.mubr.f32.mxu0 0.0
      %1006 = vmatmul.mubr.f32.gmra.mxu0 %v806
      %v1007 = vpop.f32.mrf.mxu0
      %v1008 = vadd.f32 %v682, %v1007
      %v1009 = vpop.f32.mrf.mxu0
      %1010 = vmatprep.mubr.f32.mxu0 0.0
      %1011 = vmatmul.mubr.f32.gmra.mxu0 %v809
      %v1012 = vpop.f32.mrf.mxu0
      %v1013 = vadd.f32 %v687, %v1012
      %v1014 = vpop.f32.mrf.mxu0
      %1015 = vmatprep.mubr.f32.mxu0 0.0
      %1016 = vmatmul.mubr.f32.gmra.mxu0 %v812
      %v1017 = vpop.f32.mrf.mxu0
      %v1018 = vadd.f32 %v692, %v1017
      %v1019 = vpop.f32.mrf.mxu0
      %1020 = vmatprep.mubr.f32.mxu0 0.0
      %1021 = vmatmul.mubr.f32.gmra.mxu0 %v815
      %v1022 = vpop.f32.mrf.mxu0
      %v1023 = vadd.f32 %v697, %v1022
      %v1024 = vpop.f32.mrf.mxu0
      %1025 = vmatprep.mubr.f32.mxu0 0.0
      %1026 = vmatmul.mubr.f32.gmra.mxu0 %v818
      %v1027 = vpop.f32.mrf.mxu0
      %v1028 = vadd.f32 %v702, %v1027
      %v1029 = vpop.f32.mrf.mxu0
      %1030 = vmatprep.mubr.f32.mxu0 0.0
      %1031 = vmatmul.mubr.f32.gmra.mxu0 %v821
      %v1032 = vpop.f32.mrf.mxu0
      %v1033 = vadd.f32 %v707, %v1032
      %v1034 = vpop.f32.mrf.mxu0
      %1035 = vmatprep.mubr.f32.mxu0 0.0
      %1036 = vmatmul.mubr.f32.gmra.mxu0 %v824
      %v1037 = vpop.f32.mrf.mxu0
      %v1038 = vadd.f32 %v712, %v1037
      %v1039 = vpop.f32.mrf.mxu0
      %1040 = vmatprep.mubr.f32.mxu0 0.0
      %1041 = vmatmul.mubr.f32.gmra.mxu0 %v827
      %v1042 = vpop.f32.mrf.mxu0
      %v1043 = vadd.f32 %v717, %v1042
      %v1044 = vpop.f32.mrf.mxu0
      %1045 = vmatprep.mubr.f32.mxu0 0.0
      %1046 = vmatmul.mubr.f32.gmra.mxu0 %v830
      %v1047 = vpop.f32.mrf.mxu0
      %v1048 = vadd.f32 %v722, %v1047
      %v1049 = vpop.f32.mrf.mxu0
      %1050 = vmatprep.mubr.f32.mxu0 0.0
      %1051 = vmatmul.mubr.f32.gmra.mxu0 %v833
      %v1052 = vpop.f32.mrf.mxu0
      %v1053 = vadd.f32 %v727, %v1052
      %v1054 = vpop.f32.mrf.mxu0
      %1055 = vmatprep.mubr.f32.mxu0 0.0
      %1056 = vmatmul.mubr.f32.gmra.mxu0 %v836
      %v1057 = vpop.f32.mrf.mxu0
      %v1058 = vadd.f32 %v732, %v1057
      %v1059 = vpop.f32.mrf.mxu0
      %1060 = vmatprep.mubr.f32.mxu0 0.0
      %1061 = vmatmul.mubr.f32.gmra.mxu0 %v839
      %v1062 = vpop.f32.mrf.mxu0
      %v1063 = vadd.f32 %v737, %v1062
      %v1064 = vpop.f32.mrf.mxu0
      %1065 = vmatprep.mubr.f32.mxu0 0.0
      %1066 = vmatmul.mubr.f32.gmra.mxu0 %v842
      %v1067 = vpop.f32.mrf.mxu0
      %v1068 = vadd.f32 %v742, %v1067
      %v1069 = vpop.f32.mrf.mxu0
      %1070 = vmatprep.mubr.f32.mxu0 0.0
      %1071 = vmatmul.mubr.f32.gmra.mxu0 %v845
      %v1072 = vpop.f32.mrf.mxu0
      %v1073 = vadd.f32 %v747, %v1072
      %v1074 = vpop.f32.mrf.mxu0
      %1075 = vdwg.mxu0
      %v1076 = vld [vmem:[%s4] sm:$0x1]
      %v1078 = vlaneseq
      %v1079 = vshrl.u32 %v1078, 7
      %v1080 = vsub.s32 0, %v1079
      %v1081 = vrot.slane %v1076, %v1080
      %v1083 = vadd.f32 %v918, %v1081
      %v1084 = vadd.f32 %v923, %v1081
      %v1085 = vadd.f32 %v928, %v1081
      %v1086 = vadd.f32 %v933, %v1081
      %v1087 = vadd.f32 %v938, %v1081
      %v1088 = vadd.f32 %v943, %v1081
      %v1089 = vadd.f32 %v948, %v1081
      %v1090 = vadd.f32 %v953, %v1081
      %v1091 = vadd.f32 %v958, %v1081
      %v1092 = vadd.f32 %v963, %v1081
      %v1093 = vadd.f32 %v968, %v1081
      %v1094 = vadd.f32 %v973, %v1081
      %v1095 = vadd.f32 %v978, %v1081
      %v1096 = vadd.f32 %v983, %v1081
      %v1097 = vadd.f32 %v988, %v1081
      %v1098 = vadd.f32 %v993, %v1081
      %v1099 = vadd.f32 %v998, %v1081
      %v1100 = vadd.f32 %v1003, %v1081
      %v1101 = vadd.f32 %v1008, %v1081
      %v1102 = vadd.f32 %v1013, %v1081
      %v1103 = vadd.f32 %v1018, %v1081
      %v1104 = vadd.f32 %v1023, %v1081
      %v1105 = vadd.f32 %v1028, %v1081
      %v1106 = vadd.f32 %v1033, %v1081
      %v1107 = vadd.f32 %v1038, %v1081
      %v1108 = vadd.f32 %v1043, %v1081
      %v1109 = vadd.f32 %v1048, %v1081
      %v1110 = vadd.f32 %v1053, %v1081
      %v1111 = vadd.f32 %v1058, %v1081
      %v1112 = vadd.f32 %v1063, %v1081
      %v1113 = vadd.f32 %v1068, %v1081
      %v1114 = vadd.f32 %v1073, %v1081
      %v1115 = vmax.f32 %v1083, 0.0
      %v1116 = vmax.f32 %v1084, 0.0
      %v1117 = vmax.f32 %v1085, 0.0
      %v1118 = vmax.f32 %v1086, 0.0
      %v1119 = vmax.f32 %v1087, 0.0
      %v1120 = vmax.f32 %v1088, 0.0
      %v1121 = vmax.f32 %v1089, 0.0
      %v1122 = vmax.f32 %v1090, 0.0
      %v1123 = vmax.f32 %v1091, 0.0
      %v1124 = vmax.f32 %v1092, 0.0
      %v1125 = vmax.f32 %v1093, 0.0
      %v1126 = vmax.f32 %v1094, 0.0
      %v1127 = vmax.f32 %v1095, 0.0
      %v1128 = vmax.f32 %v1096, 0.0
      %v1129 = vmax.f32 %v1097, 0.0
      %v1130 = vmax.f32 %v1098, 0.0
      %v1131 = vmax.f32 %v1099, 0.0
      %v1132 = vmax.f32 %v1100, 0.0
      %v1133 = vmax.f32 %v1101, 0.0
      %v1134 = vmax.f32 %v1102, 0.0
      %v1135 = vmax.f32 %v1103, 0.0
      %v1136 = vmax.f32 %v1104, 0.0
      %v1137 = vmax.f32 %v1105, 0.0
      %v1138 = vmax.f32 %v1106, 0.0
      %v1139 = vmax.f32 %v1107, 0.0
      %v1140 = vmax.f32 %v1108, 0.0
      %v1141 = vmax.f32 %v1109, 0.0
      %v1142 = vmax.f32 %v1110, 0.0
      %v1143 = vmax.f32 %v1111, 0.0
      %v1144 = vmax.f32 %v1112, 0.0
      %v1145 = vmax.f32 %v1113, 0.0
      %v1146 = vmax.f32 %v1114, 0.0
      %v1147 = vld [vmem:[%s5] sm:$0xff]
      %v1148 = vld [vmem:[%s5 + $0x8] sm:$0xff]
      %v1149 = vld [vmem:[%s5 + $0x10] sm:$0xff]
      %v1150 = vld [vmem:[%s5 + $0x18] sm:$0xff]
      %v1151 = vld [vmem:[%s5 + $0x20] sm:$0xff]
      %v1152 = vld [vmem:[%s5 + $0x28] sm:$0xff]
      %v1153 = vld [vmem:[%s5 + $0x30] sm:$0xff]
      %v1154 = vld [vmem:[%s5 + $0x38] sm:$0xff]
      %v1155 = vld [vmem:[%s6] sm:$0x1]
      %v1157 = vlaneseq
      %v1158 = vshrl.u32 %v1157, 7
      %v1159 = vsub.s32 0, %v1158
      %v1160 = vrot.slane %v1155, %v1159
      %vm1162 = vcmask 523264
      %v1164 = vsel %vm1162, %v1115, 0
      %v1167 = vsel %vm1162, %v1116, 0
      %v1170 = vsel %vm1162, %v1117, 0
      %v1173 = vsel %vm1162, %v1118, 0
      %v1176 = vsel %vm1162, %v1119, 0
      %v1179 = vsel %vm1162, %v1120, 0
      %v1182 = vsel %vm1162, %v1121, 0
      %v1185 = vsel %vm1162, %v1122, 0
      %v1188 = vsel %vm1162, %v1123, 0
      %v1191 = vsel %vm1162, %v1124, 0
      %v1194 = vsel %vm1162, %v1125, 0
      %v1197 = vsel %vm1162, %v1126, 0
      %v1200 = vsel %vm1162, %v1127, 0
      %v1203 = vsel %vm1162, %v1128, 0
      %v1206 = vsel %vm1162, %v1129, 0
      %v1209 = vsel %vm1162, %v1130, 0
      %v1212 = vsel %vm1162, %v1131, 0
      %v1215 = vsel %vm1162, %v1132, 0
      %v1218 = vsel %vm1162, %v1133, 0
      %v1221 = vsel %vm1162, %v1134, 0
      %v1224 = vsel %vm1162, %v1135, 0
      %v1227 = vsel %vm1162, %v1136, 0
      %v1230 = vsel %vm1162, %v1137, 0
      %v1233 = vsel %vm1162, %v1138, 0
      %v1236 = vsel %vm1162, %v1139, 0
      %v1239 = vsel %vm1162, %v1140, 0
      %v1242 = vsel %vm1162, %v1141, 0
      %v1245 = vsel %vm1162, %v1142, 0
      %v1248 = vsel %vm1162, %v1143, 0
      %v1251 = vsel %vm1162, %v1144, 0
      %v1254 = vsel %vm1162, %v1145, 0
      %v1257 = vsel %vm1162, %v1146, 0
      %1259 = vmatprep.subr.mxu0 0.0
      %1260 = vmatpush1.msra.mxu0 0.0
      %1261 = vmatprep.subr.mxu0 0.0
      %1262 = vmatpush1.msra.mxu0 0.0
      %1263 = vmatprep.subr.mxu0 0.0
      %1264 = vmatpush1.msra.mxu0 0.0
      %1265 = vmatprep.subr.mxu0 0.0
      %1266 = vmatpush1.msra.mxu0 0.0
      %1267 = vmatprep.subr.mxu0 0.0
      %1268 = vmatpush1.msra.mxu0 0.0
      %1269 = vmatprep.subr.mxu0 0.0
      %1270 = vmatpush1.msra.mxu0 0.0
      %1271 = vmatprep.subr.mxu0 0.0
      %1272 = vmatpush1.msra.mxu0 0.0
      %1273 = vmatprep.subr.mxu0 0.0
      %1274 = vmatpush1.msra.mxu0 0.0
      %1275 = vmatprep.subr.mxu0 0.0
      %1276 = vmatpush1.msra.mxu0 %v1154
      %1277 = vmatprep.subr.mxu0 0.0
      %1278 = vmatpush1.msra.mxu0 %v1153
      %1279 = vmatprep.subr.mxu0 0.0
      %1280 = vmatpush1.msra.mxu0 %v1152
      %1281 = vmatprep.subr.mxu0 0.0
      %1282 = vmatpush1.msra.mxu0 %v1151
      %1283 = vmatprep.subr.mxu0 0.0
      %1284 = vmatpush1.msra.mxu0 %v1150
      %1285 = vmatprep.subr.mxu0 0.0
      %1286 = vmatpush1.msra.mxu0 %v1149
      %1287 = vmatprep.subr.mxu0 0.0
      %1288 = vmatpush1.msra.mxu0 %v1148
      %1289 = vmatprep.subr.mxu0 0.0
      %1290 = vmatpush1.msra.mxu0 %v1147
      %1291 = vmatprep.subr.mxu0 0.0
      %1292 = vmatpush2.msra.mxu0 0.0
      %1293 = vmatprep.subr.mxu0 0.0
      %1294 = vmatpush2.msra.mxu0 0.0
      %1295 = vmatprep.subr.mxu0 0.0
      %1296 = vmatpush2.msra.mxu0 0.0
      %1297 = vmatprep.subr.mxu0 0.0
      %1298 = vmatpush2.msra.mxu0 0.0
      %1299 = vmatprep.subr.mxu0 0.0
      %1300 = vmatpush2.msra.mxu0 0.0
      %1301 = vmatprep.subr.mxu0 0.0
      %1302 = vmatpush2.msra.mxu0 0.0
      %1303 = vmatprep.subr.mxu0 0.0
      %1304 = vmatpush2.msra.mxu0 0.0
      %1305 = vmatprep.subr.mxu0 0.0
      %1306 = vmatpush2.msra.mxu0 0.0
      %1307 = vmatprep.subr.mxu0 0.0
      %1308 = vmatpush2.msra.mxu0 0.0
      %1309 = vmatprep.subr.mxu0 0.0
      %1310 = vmatpush2.msra.mxu0 0.0
      %1311 = vmatprep.subr.mxu0 0.0
      %1312 = vmatpush2.msra.mxu0 0.0
      %1313 = vmatprep.subr.mxu0 0.0
      %1314 = vmatpush2.msra.mxu0 0.0
      %1315 = vmatprep.subr.mxu0 0.0
      %1316 = vmatpush2.msra.mxu0 0.0
      %1317 = vmatprep.subr.mxu0 0.0
      %1318 = vmatpush2.msra.mxu0 0.0
      %1319 = vmatprep.subr.mxu0 0.0
      %1320 = vmatpush2.msra.mxu0 0.0
      %1321 = vmatprep.subr.mxu0 0.0
      %1322 = vmatpush2.msra.mxu0 0.0
      %1323 = vmatprep.mubr.f32.mxu0 0.0
      %1324 = vmatmul.mubr.f32.gmra.mxu0 %v1164
      %v1325 = vpop.f32.mrf.mxu0
      %v1326 = vadd.f32 %v1160, %v1325
      %v1327 = vpop.f32.mrf.mxu0
      %1328 = vmatprep.mubr.f32.mxu0 0.0
      %1329 = vmatmul.mubr.f32.gmra.mxu0 %v1167
      %v1330 = vpop.f32.mrf.mxu0
      %v1331 = vadd.f32 %v1160, %v1330
      %v1332 = vpop.f32.mrf.mxu0
      %1333 = vmatprep.mubr.f32.mxu0 0.0
      %1334 = vmatmul.mubr.f32.gmra.mxu0 %v1170
      %v1335 = vpop.f32.mrf.mxu0
      %v1336 = vadd.f32 %v1160, %v1335
      %v1337 = vpop.f32.mrf.mxu0
      %1338 = vmatprep.mubr.f32.mxu0 0.0
      %1339 = vmatmul.mubr.f32.gmra.mxu0 %v1173
      %v1340 = vpop.f32.mrf.mxu0
      %v1341 = vadd.f32 %v1160, %v1340
      %v1342 = vpop.f32.mrf.mxu0
      %1343 = vmatprep.mubr.f32.mxu0 0.0
      %1344 = vmatmul.mubr.f32.gmra.mxu0 %v1176
      %v1345 = vpop.f32.mrf.mxu0
      %v1346 = vadd.f32 %v1160, %v1345
      %v1347 = vpop.f32.mrf.mxu0
      %1348 = vmatprep.mubr.f32.mxu0 0.0
      %1349 = vmatmul.mubr.f32.gmra.mxu0 %v1179
      %v1350 = vpop.f32.mrf.mxu0
      %v1351 = vadd.f32 %v1160, %v1350
      %v1352 = vpop.f32.mrf.mxu0
      %1353 = vmatprep.mubr.f32.mxu0 0.0
      %1354 = vmatmul.mubr.f32.gmra.mxu0 %v1182
      %v1355 = vpop.f32.mrf.mxu0
      %v1356 = vadd.f32 %v1160, %v1355
      %v1357 = vpop.f32.mrf.mxu0
      %1358 = vmatprep.mubr.f32.mxu0 0.0
      %1359 = vmatmul.mubr.f32.gmra.mxu0 %v1185
      %v1360 = vpop.f32.mrf.mxu0
      %v1361 = vadd.f32 %v1160, %v1360
      %v1362 = vpop.f32.mrf.mxu0
      %1363 = vmatprep.mubr.f32.mxu0 0.0
      %1364 = vmatmul.mubr.f32.gmra.mxu0 %v1188
      %v1365 = vpop.f32.mrf.mxu0
      %v1366 = vadd.f32 %v1160, %v1365
      %v1367 = vpop.f32.mrf.mxu0
      %1368 = vmatprep.mubr.f32.mxu0 0.0
      %1369 = vmatmul.mubr.f32.gmra.mxu0 %v1191
      %v1370 = vpop.f32.mrf.mxu0
      %v1371 = vadd.f32 %v1160, %v1370
      %v1372 = vpop.f32.mrf.mxu0
      %1373 = vmatprep.mubr.f32.mxu0 0.0
      %1374 = vmatmul.mubr.f32.gmra.mxu0 %v1194
      %v1375 = vpop.f32.mrf.mxu0
      %v1376 = vadd.f32 %v1160, %v1375
      %v1377 = vpop.f32.mrf.mxu0
      %1378 = vmatprep.mubr.f32.mxu0 0.0
      %1379 = vmatmul.mubr.f32.gmra.mxu0 %v1197
      %v1380 = vpop.f32.mrf.mxu0
      %v1381 = vadd.f32 %v1160, %v1380
      %v1382 = vpop.f32.mrf.mxu0
      %1383 = vmatprep.mubr.f32.mxu0 0.0
      %1384 = vmatmul.mubr.f32.gmra.mxu0 %v1200
      %v1385 = vpop.f32.mrf.mxu0
      %v1386 = vadd.f32 %v1160, %v1385
      %v1387 = vpop.f32.mrf.mxu0
      %1388 = vmatprep.mubr.f32.mxu0 0.0
      %1389 = vmatmul.mubr.f32.gmra.mxu0 %v1203
      %v1390 = vpop.f32.mrf.mxu0
      %v1391 = vadd.f32 %v1160, %v1390
      %v1392 = vpop.f32.mrf.mxu0
      %1393 = vmatprep.mubr.f32.mxu0 0.0
      %1394 = vmatmul.mubr.f32.gmra.mxu0 %v1206
      %v1395 = vpop.f32.mrf.mxu0
      %v1396 = vadd.f32 %v1160, %v1395
      %v1397 = vpop.f32.mrf.mxu0
      %1398 = vmatprep.mubr.f32.mxu0 0.0
      %1399 = vmatmul.mubr.f32.gmra.mxu0 %v1209
      %v1400 = vpop.f32.mrf.mxu0
      %v1401 = vadd.f32 %v1160, %v1400
      %v1402 = vpop.f32.mrf.mxu0
      %1403 = vmatprep.mubr.f32.mxu0 0.0
      %1404 = vmatmul.mubr.f32.gmra.mxu0 %v1212
      %v1405 = vpop.f32.mrf.mxu0
      %v1406 = vadd.f32 %v1160, %v1405
      %v1407 = vpop.f32.mrf.mxu0
      %1408 = vmatprep.mubr.f32.mxu0 0.0
      %1409 = vmatmul.mubr.f32.gmra.mxu0 %v1215
      %v1410 = vpop.f32.mrf.mxu0
      %v1411 = vadd.f32 %v1160, %v1410
      %v1412 = vpop.f32.mrf.mxu0
      %1413 = vmatprep.mubr.f32.mxu0 0.0
      %1414 = vmatmul.mubr.f32.gmra.mxu0 %v1218
      %v1415 = vpop.f32.mrf.mxu0
      %v1416 = vadd.f32 %v1160, %v1415
      %v1417 = vpop.f32.mrf.mxu0
      %1418 = vmatprep.mubr.f32.mxu0 0.0
      %1419 = vmatmul.mubr.f32.gmra.mxu0 %v1221
      %v1420 = vpop.f32.mrf.mxu0
      %v1421 = vadd.f32 %v1160, %v1420
      %v1422 = vpop.f32.mrf.mxu0
      %1423 = vmatprep.mubr.f32.mxu0 0.0
      %1424 = vmatmul.mubr.f32.gmra.mxu0 %v1224
      %v1425 = vpop.f32.mrf.mxu0
      %v1426 = vadd.f32 %v1160, %v1425
      %v1427 = vpop.f32.mrf.mxu0
      %1428 = vmatprep.mubr.f32.mxu0 0.0
      %1429 = vmatmul.mubr.f32.gmra.mxu0 %v1227
      %v1430 = vpop.f32.mrf.mxu0
      %v1431 = vadd.f32 %v1160, %v1430
      %v1432 = vpop.f32.mrf.mxu0
      %1433 = vmatprep.mubr.f32.mxu0 0.0
      %1434 = vmatmul.mubr.f32.gmra.mxu0 %v1230
      %v1435 = vpop.f32.mrf.mxu0
      %v1436 = vadd.f32 %v1160, %v1435
      %v1437 = vpop.f32.mrf.mxu0
      %1438 = vmatprep.mubr.f32.mxu0 0.0
      %1439 = vmatmul.mubr.f32.gmra.mxu0 %v1233
      %v1440 = vpop.f32.mrf.mxu0
      %v1441 = vadd.f32 %v1160, %v1440
      %v1442 = vpop.f32.mrf.mxu0
      %1443 = vmatprep.mubr.f32.mxu0 0.0
      %1444 = vmatmul.mubr.f32.gmra.mxu0 %v1236
      %v1445 = vpop.f32.mrf.mxu0
      %v1446 = vadd.f32 %v1160, %v1445
      %v1447 = vpop.f32.mrf.mxu0
      %1448 = vmatprep.mubr.f32.mxu0 0.0
      %1449 = vmatmul.mubr.f32.gmra.mxu0 %v1239
      %v1450 = vpop.f32.mrf.mxu0
      %v1451 = vadd.f32 %v1160, %v1450
      %v1452 = vpop.f32.mrf.mxu0
      %1453 = vmatprep.mubr.f32.mxu0 0.0
      %1454 = vmatmul.mubr.f32.gmra.mxu0 %v1242
      %v1455 = vpop.f32.mrf.mxu0
      %v1456 = vadd.f32 %v1160, %v1455
      %v1457 = vpop.f32.mrf.mxu0
      %1458 = vmatprep.mubr.f32.mxu0 0.0
      %1459 = vmatmul.mubr.f32.gmra.mxu0 %v1245
      %v1460 = vpop.f32.mrf.mxu0
      %v1461 = vadd.f32 %v1160, %v1460
      %v1462 = vpop.f32.mrf.mxu0
      %1463 = vmatprep.mubr.f32.mxu0 0.0
      %1464 = vmatmul.mubr.f32.gmra.mxu0 %v1248
      %v1465 = vpop.f32.mrf.mxu0
      %v1466 = vadd.f32 %v1160, %v1465
      %v1467 = vpop.f32.mrf.mxu0
      %1468 = vmatprep.mubr.f32.mxu0 0.0
      %1469 = vmatmul.mubr.f32.gmra.mxu0 %v1251
      %v1470 = vpop.f32.mrf.mxu0
      %v1471 = vadd.f32 %v1160, %v1470
      %v1472 = vpop.f32.mrf.mxu0
      %1473 = vmatprep.mubr.f32.mxu0 0.0
      %1474 = vmatmul.mubr.f32.gmra.mxu0 %v1254
      %v1475 = vpop.f32.mrf.mxu0
      %v1476 = vadd.f32 %v1160, %v1475
      %v1477 = vpop.f32.mrf.mxu0
      %1478 = vmatprep.mubr.f32.mxu0 0.0
      %1479 = vmatmul.mubr.f32.gmra.mxu0 %v1257
      %v1480 = vpop.f32.mrf.mxu0
      %v1481 = vadd.f32 %v1160, %v1480
      %v1482 = vpop.f32.mrf.mxu0
      %1483 = vdwg.mxu0
      %v1484 = vmax.f32 %v1326, 0.0
      %v1485 = vmax.f32 %v1331, 0.0
      %v1486 = vmax.f32 %v1336, 0.0
      %v1487 = vmax.f32 %v1341, 0.0
      %v1488 = vmax.f32 %v1346, 0.0
      %v1489 = vmax.f32 %v1351, 0.0
      %v1490 = vmax.f32 %v1356, 0.0
      %v1491 = vmax.f32 %v1361, 0.0
      %v1492 = vmax.f32 %v1366, 0.0
      %v1493 = vmax.f32 %v1371, 0.0
      %v1494 = vmax.f32 %v1376, 0.0
      %v1495 = vmax.f32 %v1381, 0.0
      %v1496 = vmax.f32 %v1386, 0.0
      %v1497 = vmax.f32 %v1391, 0.0
      %v1498 = vmax.f32 %v1396, 0.0
      %v1499 = vmax.f32 %v1401, 0.0
      %v1500 = vmax.f32 %v1406, 0.0
      %v1501 = vmax.f32 %v1411, 0.0
      %v1502 = vmax.f32 %v1416, 0.0
      %v1503 = vmax.f32 %v1421, 0.0
      %v1504 = vmax.f32 %v1426, 0.0
      %v1505 = vmax.f32 %v1431, 0.0
      %v1506 = vmax.f32 %v1436, 0.0
      %v1507 = vmax.f32 %v1441, 0.0
      %v1508 = vmax.f32 %v1446, 0.0
      %v1509 = vmax.f32 %v1451, 0.0
      %v1510 = vmax.f32 %v1456, 0.0
      %v1511 = vmax.f32 %v1461, 0.0
      %v1512 = vmax.f32 %v1466, 0.0
      %v1513 = vmax.f32 %v1471, 0.0
      %v1514 = vmax.f32 %v1476, 0.0
      %v1515 = vmax.f32 %v1481, 0.0
      %v1516 = vld [vmem:[%s7] sm:$0xff]
      %v1517 = vld [vmem:[%s7 + $0x8] sm:$0xff]
      %v1518 = vld [vmem:[%s7 + $0x10] sm:$0xff]
      %v1519 = vld [vmem:[%s7 + $0x18] sm:$0xff]
      %v1520 = vld [vmem:[%s7 + $0x20] sm:$0xff]
      %v1521 = vld [vmem:[%s7 + $0x28] sm:$0xff]
      %v1522 = vld [vmem:[%s7 + $0x30] sm:$0xff]
      %v1523 = vld [vmem:[%s7 + $0x38] sm:$0xff]
      %v1524 = vld [vmem:[%s8] sm:$0x1]
      %v1526 = vlaneseq
      %v1527 = vshrl.u32 %v1526, 7
      %v1528 = vsub.s32 0, %v1527
      %v1529 = vrot.slane %v1524, %v1528
      %v1532 = vsel %vm1162, %v1484, 0
      %v1535 = vsel %vm1162, %v1485, 0
      %v1538 = vsel %vm1162, %v1486, 0
      %v1541 = vsel %vm1162, %v1487, 0
      %v1544 = vsel %vm1162, %v1488, 0
      %v1547 = vsel %vm1162, %v1489, 0
      %v1550 = vsel %vm1162, %v1490, 0
      %v1553 = vsel %vm1162, %v1491, 0
      %v1556 = vsel %vm1162, %v1492, 0
      %v1559 = vsel %vm1162, %v1493, 0
      %v1562 = vsel %vm1162, %v1494, 0
      %v1565 = vsel %vm1162, %v1495, 0
      %v1568 = vsel %vm1162, %v1496, 0
      %v1571 = vsel %vm1162, %v1497, 0
      %v1574 = vsel %vm1162, %v1498, 0
      %v1577 = vsel %vm1162, %v1499, 0
      %v1580 = vsel %vm1162, %v1500, 0
      %v1583 = vsel %vm1162, %v1501, 0
      %v1586 = vsel %vm1162, %v1502, 0
      %v1589 = vsel %vm1162, %v1503, 0
      %v1592 = vsel %vm1162, %v1504, 0
      %v1595 = vsel %vm1162, %v1505, 0
      %v1598 = vsel %vm1162, %v1506, 0
      %v1601 = vsel %vm1162, %v1507, 0
      %v1604 = vsel %vm1162, %v1508, 0
      %v1607 = vsel %vm1162, %v1509, 0
      %v1610 = vsel %vm1162, %v1510, 0
      %v1613 = vsel %vm1162, %v1511, 0
      %v1616 = vsel %vm1162, %v1512, 0
      %v1619 = vsel %vm1162, %v1513, 0
      %v1622 = vsel %vm1162, %v1514, 0
      %v1625 = vsel %vm1162, %v1515, 0
      %1627 = vmatprep.subr.mxu0 0.0
      %1628 = vmatpush1.msra.mxu0 0.0
      %1629 = vmatprep.subr.mxu0 0.0
      %1630 = vmatpush1.msra.mxu0 0.0
      %1631 = vmatprep.subr.mxu0 0.0
      %1632 = vmatpush1.msra.mxu0 0.0
      %1633 = vmatprep.subr.mxu0 0.0
      %1634 = vmatpush1.msra.mxu0 0.0
      %1635 = vmatprep.subr.mxu0 0.0
      %1636 = vmatpush1.msra.mxu0 0.0
      %1637 = vmatprep.subr.mxu0 0.0
      %1638 = vmatpush1.msra.mxu0 0.0
      %1639 = vmatprep.subr.mxu0 0.0
      %1640 = vmatpush1.msra.mxu0 0.0
      %1641 = vmatprep.subr.mxu0 0.0
      %1642 = vmatpush1.msra.mxu0 0.0
      %1643 = vmatprep.subr.mxu0 0.0
      %1644 = vmatpush1.msra.mxu0 %v1523
      %1645 = vmatprep.subr.mxu0 0.0
      %1646 = vmatpush1.msra.mxu0 %v1522
      %1647 = vmatprep.subr.mxu0 0.0
      %1648 = vmatpush1.msra.mxu0 %v1521
      %1649 = vmatprep.subr.mxu0 0.0
      %1650 = vmatpush1.msra.mxu0 %v1520
      %1651 = vmatprep.subr.mxu0 0.0
      %1652 = vmatpush1.msra.mxu0 %v1519
      %1653 = vmatprep.subr.mxu0 0.0
      %1654 = vmatpush1.msra.mxu0 %v1518
      %1655 = vmatprep.subr.mxu0 0.0
      %1656 = vmatpush1.msra.mxu0 %v1517
      %1657 = vmatprep.subr.mxu0 0.0
      %1658 = vmatpush1.msra.mxu0 %v1516
      %1659 = vmatprep.subr.mxu0 0.0
      %1660 = vmatpush2.msra.mxu0 0.0
      %1661 = vmatprep.subr.mxu0 0.0
      %1662 = vmatpush2.msra.mxu0 0.0
      %1663 = vmatprep.subr.mxu0 0.0
      %1664 = vmatpush2.msra.mxu0 0.0
      %1665 = vmatprep.subr.mxu0 0.0
      %1666 = vmatpush2.msra.mxu0 0.0
      %1667 = vmatprep.subr.mxu0 0.0
      %1668 = vmatpush2.msra.mxu0 0.0
      %1669 = vmatprep.subr.mxu0 0.0
      %1670 = vmatpush2.msra.mxu0 0.0
      %1671 = vmatprep.subr.mxu0 0.0
      %1672 = vmatpush2.msra.mxu0 0.0
      %1673 = vmatprep.subr.mxu0 0.0
      %1674 = vmatpush2.msra.mxu0 0.0
      %1675 = vmatprep.subr.mxu0 0.0
      %1676 = vmatpush2.msra.mxu0 0.0
      %1677 = vmatprep.subr.mxu0 0.0
      %1678 = vmatpush2.msra.mxu0 0.0
      %1679 = vmatprep.subr.mxu0 0.0
      %1680 = vmatpush2.msra.mxu0 0.0
      %1681 = vmatprep.subr.mxu0 0.0
      %1682 = vmatpush2.msra.mxu0 0.0
      %1683 = vmatprep.subr.mxu0 0.0
      %1684 = vmatpush2.msra.mxu0 0.0
      %1685 = vmatprep.subr.mxu0 0.0
      %1686 = vmatpush2.msra.mxu0 0.0
      %1687 = vmatprep.subr.mxu0 0.0
      %1688 = vmatpush2.msra.mxu0 0.0
      %1689 = vmatprep.subr.mxu0 0.0
      %1690 = vmatpush2.msra.mxu0 0.0
      %1691 = vmatprep.mubr.f32.mxu0 0.0
      %1692 = vmatmul.mubr.f32.gmra.mxu0 %v1532
      %v1693 = vpop.f32.mrf.mxu0
      %v1694 = vadd.f32 %v1529, %v1693
      %v1695 = vpop.f32.mrf.mxu0
      %1696 = vmatprep.mubr.f32.mxu0 0.0
      %1697 = vmatmul.mubr.f32.gmra.mxu0 %v1535
      %v1698 = vpop.f32.mrf.mxu0
      %v1699 = vadd.f32 %v1529, %v1698
      %v1700 = vpop.f32.mrf.mxu0
      %1701 = vmatprep.mubr.f32.mxu0 0.0
      %1702 = vmatmul.mubr.f32.gmra.mxu0 %v1538
      %v1703 = vpop.f32.mrf.mxu0
      %v1704 = vadd.f32 %v1529, %v1703
      %v1705 = vpop.f32.mrf.mxu0
      %1706 = vmatprep.mubr.f32.mxu0 0.0
      %1707 = vmatmul.mubr.f32.gmra.mxu0 %v1541
      %v1708 = vpop.f32.mrf.mxu0
      %v1709 = vadd.f32 %v1529, %v1708
      %v1710 = vpop.f32.mrf.mxu0
      %1711 = vmatprep.mubr.f32.mxu0 0.0
      %1712 = vmatmul.mubr.f32.gmra.mxu0 %v1544
      %v1713 = vpop.f32.mrf.mxu0
      %v1714 = vadd.f32 %v1529, %v1713
      %v1715 = vpop.f32.mrf.mxu0
      %1716 = vmatprep.mubr.f32.mxu0 0.0
      %1717 = vmatmul.mubr.f32.gmra.mxu0 %v1547
      %v1718 = vpop.f32.mrf.mxu0
      %v1719 = vadd.f32 %v1529, %v1718
      %v1720 = vpop.f32.mrf.mxu0
      %1721 = vmatprep.mubr.f32.mxu0 0.0
      %1722 = vmatmul.mubr.f32.gmra.mxu0 %v1550
      %v1723 = vpop.f32.mrf.mxu0
      %v1724 = vadd.f32 %v1529, %v1723
      %v1725 = vpop.f32.mrf.mxu0
      %1726 = vmatprep.mubr.f32.mxu0 0.0
      %1727 = vmatmul.mubr.f32.gmra.mxu0 %v1553
      %v1728 = vpop.f32.mrf.mxu0
      %v1729 = vadd.f32 %v1529, %v1728
      %v1730 = vpop.f32.mrf.mxu0
      %1731 = vmatprep.mubr.f32.mxu0 0.0
      %1732 = vmatmul.mubr.f32.gmra.mxu0 %v1556
      %v1733 = vpop.f32.mrf.mxu0
      %v1734 = vadd.f32 %v1529, %v1733
      %v1735 = vpop.f32.mrf.mxu0
      %1736 = vmatprep.mubr.f32.mxu0 0.0
      %1737 = vmatmul.mubr.f32.gmra.mxu0 %v1559
      %v1738 = vpop.f32.mrf.mxu0
      %v1739 = vadd.f32 %v1529, %v1738
      %v1740 = vpop.f32.mrf.mxu0
      %1741 = vmatprep.mubr.f32.mxu0 0.0
      %1742 = vmatmul.mubr.f32.gmra.mxu0 %v1562
      %v1743 = vpop.f32.mrf.mxu0
      %v1744 = vadd.f32 %v1529, %v1743
      %v1745 = vpop.f32.mrf.mxu0
      %1746 = vmatprep.mubr.f32.mxu0 0.0
      %1747 = vmatmul.mubr.f32.gmra.mxu0 %v1565
      %v1748 = vpop.f32.mrf.mxu0
      %v1749 = vadd.f32 %v1529, %v1748
      %v1750 = vpop.f32.mrf.mxu0
      %1751 = vmatprep.mubr.f32.mxu0 0.0
      %1752 = vmatmul.mubr.f32.gmra.mxu0 %v1568
      %v1753 = vpop.f32.mrf.mxu0
      %v1754 = vadd.f32 %v1529, %v1753
      %v1755 = vpop.f32.mrf.mxu0
      %1756 = vmatprep.mubr.f32.mxu0 0.0
      %1757 = vmatmul.mubr.f32.gmra.mxu0 %v1571
      %v1758 = vpop.f32.mrf.mxu0
      %v1759 = vadd.f32 %v1529, %v1758
      %v1760 = vpop.f32.mrf.mxu0
      %1761 = vmatprep.mubr.f32.mxu0 0.0
      %1762 = vmatmul.mubr.f32.gmra.mxu0 %v1574
      %v1763 = vpop.f32.mrf.mxu0
      %v1764 = vadd.f32 %v1529, %v1763
      %v1765 = vpop.f32.mrf.mxu0
      %1766 = vmatprep.mubr.f32.mxu0 0.0
      %1767 = vmatmul.mubr.f32.gmra.mxu0 %v1577
      %v1768 = vpop.f32.mrf.mxu0
      %v1769 = vadd.f32 %v1529, %v1768
      %v1770 = vpop.f32.mrf.mxu0
      %1771 = vmatprep.mubr.f32.mxu0 0.0
      %1772 = vmatmul.mubr.f32.gmra.mxu0 %v1580
      %v1773 = vpop.f32.mrf.mxu0
      %v1774 = vadd.f32 %v1529, %v1773
      %v1775 = vpop.f32.mrf.mxu0
      %1776 = vmatprep.mubr.f32.mxu0 0.0
      %1777 = vmatmul.mubr.f32.gmra.mxu0 %v1583
      %v1778 = vpop.f32.mrf.mxu0
      %v1779 = vadd.f32 %v1529, %v1778
      %v1780 = vpop.f32.mrf.mxu0
      %1781 = vmatprep.mubr.f32.mxu0 0.0
      %1782 = vmatmul.mubr.f32.gmra.mxu0 %v1586
      %v1783 = vpop.f32.mrf.mxu0
      %v1784 = vadd.f32 %v1529, %v1783
      %v1785 = vpop.f32.mrf.mxu0
      %1786 = vmatprep.mubr.f32.mxu0 0.0
      %1787 = vmatmul.mubr.f32.gmra.mxu0 %v1589
      %v1788 = vpop.f32.mrf.mxu0
      %v1789 = vadd.f32 %v1529, %v1788
      %v1790 = vpop.f32.mrf.mxu0
      %1791 = vmatprep.mubr.f32.mxu0 0.0
      %1792 = vmatmul.mubr.f32.gmra.mxu0 %v1592
      %v1793 = vpop.f32.mrf.mxu0
      %v1794 = vadd.f32 %v1529, %v1793
      %v1795 = vpop.f32.mrf.mxu0
      %1796 = vmatprep.mubr.f32.mxu0 0.0
      %1797 = vmatmul.mubr.f32.gmra.mxu0 %v1595
      %v1798 = vpop.f32.mrf.mxu0
      %v1799 = vadd.f32 %v1529, %v1798
      %v1800 = vpop.f32.mrf.mxu0
      %1801 = vmatprep.mubr.f32.mxu0 0.0
      %1802 = vmatmul.mubr.f32.gmra.mxu0 %v1598
      %v1803 = vpop.f32.mrf.mxu0
      %v1804 = vadd.f32 %v1529, %v1803
      %v1805 = vpop.f32.mrf.mxu0
      %1806 = vmatprep.mubr.f32.mxu0 0.0
      %1807 = vmatmul.mubr.f32.gmra.mxu0 %v1601
      %v1808 = vpop.f32.mrf.mxu0
      %v1809 = vadd.f32 %v1529, %v1808
      %v1810 = vpop.f32.mrf.mxu0
      %1811 = vmatprep.mubr.f32.mxu0 0.0
      %1812 = vmatmul.mubr.f32.gmra.mxu0 %v1604
      %v1813 = vpop.f32.mrf.mxu0
      %v1814 = vadd.f32 %v1529, %v1813
      %v1815 = vpop.f32.mrf.mxu0
      %1816 = vmatprep.mubr.f32.mxu0 0.0
      %1817 = vmatmul.mubr.f32.gmra.mxu0 %v1607
      %v1818 = vpop.f32.mrf.mxu0
      %v1819 = vadd.f32 %v1529, %v1818
      %v1820 = vpop.f32.mrf.mxu0
      %1821 = vmatprep.mubr.f32.mxu0 0.0
      %1822 = vmatmul.mubr.f32.gmra.mxu0 %v1610
      %v1823 = vpop.f32.mrf.mxu0
      %v1824 = vadd.f32 %v1529, %v1823
      %v1825 = vpop.f32.mrf.mxu0
      %1826 = vmatprep.mubr.f32.mxu0 0.0
      %1827 = vmatmul.mubr.f32.gmra.mxu0 %v1613
      %v1828 = vpop.f32.mrf.mxu0
      %v1829 = vadd.f32 %v1529, %v1828
      %v1830 = vpop.f32.mrf.mxu0
      %1831 = vmatprep.mubr.f32.mxu0 0.0
      %1832 = vmatmul.mubr.f32.gmra.mxu0 %v1616
      %v1833 = vpop.f32.mrf.mxu0
      %v1834 = vadd.f32 %v1529, %v1833
      %v1835 = vpop.f32.mrf.mxu0
      %1836 = vmatprep.mubr.f32.mxu0 0.0
      %1837 = vmatmul.mubr.f32.gmra.mxu0 %v1619
      %v1838 = vpop.f32.mrf.mxu0
      %v1839 = vadd.f32 %v1529, %v1838
      %v1840 = vpop.f32.mrf.mxu0
      %1841 = vmatprep.mubr.f32.mxu0 0.0
      %1842 = vmatmul.mubr.f32.gmra.mxu0 %v1622
      %v1843 = vpop.f32.mrf.mxu0
      %v1844 = vadd.f32 %v1529, %v1843
      %v1845 = vpop.f32.mrf.mxu0
      %1846 = vmatprep.mubr.f32.mxu0 0.0
      %1847 = vmatmul.mubr.f32.gmra.mxu0 %v1625
      %v1848 = vpop.f32.mrf.mxu0
      %v1849 = vadd.f32 %v1529, %v1848
      %v1850 = vpop.f32.mrf.mxu0
      %1851 = vdwg.mxu0
      %v1852 = vtanh.pop %v1694
      %v1853 = vtanh.pop %v1699
      %v1854 = vtanh.pop %v1704
      %v1855 = vtanh.pop %v1709
      %v1856 = vtanh.pop %v1714
      %v1857 = vtanh.pop %v1719
      %v1858 = vtanh.pop %v1724
      %v1859 = vtanh.pop %v1729
      %v1860 = vtanh.pop %v1734
      %v1861 = vtanh.pop %v1739
      %v1862 = vtanh.pop %v1744
      %v1863 = vtanh.pop %v1749
      %v1864 = vtanh.pop %v1754
      %v1865 = vtanh.pop %v1759
      %v1866 = vtanh.pop %v1764
      %v1867 = vtanh.pop %v1769
      %v1868 = vtanh.pop %v1774
      %v1869 = vtanh.pop %v1779
      %v1870 = vtanh.pop %v1784
      %v1871 = vtanh.pop %v1789
      %v1872 = vtanh.pop %v1794
      %v1873 = vtanh.pop %v1799
      %v1874 = vtanh.pop %v1804
      %v1875 = vtanh.pop %v1809
      %v1876 = vtanh.pop %v1814
      %v1877 = vtanh.pop %v1819
      %v1878 = vtanh.pop %v1824
      %v1879 = vtanh.pop %v1829
      %v1880 = vtanh.pop %v1834
      %v1881 = vtanh.pop %v1839
      %v1882 = vtanh.pop %v1844
      %v1883 = vtanh.pop %v1849
      %v1884 = vadd.f32 %v1852, 1.0
      %v1885 = vadd.f32 %v1853, 1.0
      %v1886 = vadd.f32 %v1854, 1.0
      %v1887 = vadd.f32 %v1855, 1.0
      %v1888 = vadd.f32 %v1856, 1.0
      %v1889 = vadd.f32 %v1857, 1.0
      %v1890 = vadd.f32 %v1858, 1.0
      %v1891 = vadd.f32 %v1859, 1.0
      %v1892 = vadd.f32 %v1860, 1.0
      %v1893 = vadd.f32 %v1861, 1.0
      %v1894 = vadd.f32 %v1862, 1.0
      %v1895 = vadd.f32 %v1863, 1.0
      %v1896 = vadd.f32 %v1864, 1.0
      %v1897 = vadd.f32 %v1865, 1.0
      %v1898 = vadd.f32 %v1866, 1.0
      %v1899 = vadd.f32 %v1867, 1.0
      %v1900 = vadd.f32 %v1868, 1.0
      %v1901 = vadd.f32 %v1869, 1.0
      %v1902 = vadd.f32 %v1870, 1.0
      %v1903 = vadd.f32 %v1871, 1.0
      %v1904 = vadd.f32 %v1872, 1.0
      %v1905 = vadd.f32 %v1873, 1.0
      %v1906 = vadd.f32 %v1874, 1.0
      %v1907 = vadd.f32 %v1875, 1.0
      %v1908 = vadd.f32 %v1876, 1.0
      %v1909 = vadd.f32 %v1877, 1.0
      %v1910 = vadd.f32 %v1878, 1.0
      %v1911 = vadd.f32 %v1879, 1.0
      %v1912 = vadd.f32 %v1880, 1.0
      %v1913 = vadd.f32 %v1881, 1.0
      %v1914 = vadd.f32 %v1882, 1.0
      %v1915 = vadd.f32 %v1883, 1.0
      %v1916 = vmul.f32 %v1884, 0.5
      %v1917 = vmul.f32 %v1885, 0.5
      %v1918 = vmul.f32 %v1886, 0.5
      %v1919 = vmul.f32 %v1887, 0.5
      %v1920 = vmul.f32 %v1888, 0.5
      %v1921 = vmul.f32 %v1889, 0.5
      %v1922 = vmul.f32 %v1890, 0.5
      %v1923 = vmul.f32 %v1891, 0.5
      %v1924 = vmul.f32 %v1892, 0.5
      %v1925 = vmul.f32 %v1893, 0.5
      %v1926 = vmul.f32 %v1894, 0.5
      %v1927 = vmul.f32 %v1895, 0.5
      %v1928 = vmul.f32 %v1896, 0.5
      %v1929 = vmul.f32 %v1897, 0.5
      %v1930 = vmul.f32 %v1898, 0.5
      %v1931 = vmul.f32 %v1899, 0.5
      %v1932 = vmul.f32 %v1900, 0.5
      %v1933 = vmul.f32 %v1901, 0.5
      %v1934 = vmul.f32 %v1902, 0.5
      %v1935 = vmul.f32 %v1903, 0.5
      %v1936 = vmul.f32 %v1904, 0.5
      %v1937 = vmul.f32 %v1905, 0.5
      %v1938 = vmul.f32 %v1906, 0.5
      %v1939 = vmul.f32 %v1907, 0.5
      %v1940 = vmul.f32 %v1908, 0.5
      %v1941 = vmul.f32 %v1909, 0.5
      %v1942 = vmul.f32 %v1910, 0.5
      %v1943 = vmul.f32 %v1911, 0.5
      %v1944 = vmul.f32 %v1912, 0.5
      %v1945 = vmul.f32 %v1913, 0.5
      %v1946 = vmul.f32 %v1914, 0.5
      %v1947 = vmul.f32 %v1915, 0.5
      %vm1948 = vcmask 23552
      %1949 = vst.msk [vmem:[%s356] sm:$0xff] %vm1948, %v1916
      %1950 = vst.msk [vmem:[%s356 + $0x8] sm:$0xff] %vm1948, %v1917
      %1951 = vst.msk [vmem:[%s356 + $0x10] sm:$0xff] %vm1948, %v1918
      %1952 = vst.msk [vmem:[%s356 + $0x18] sm:$0xff] %vm1948, %v1919
      %1953 = vst.msk [vmem:[%s356 + $0x20] sm:$0xff] %vm1948, %v1920
      %1954 = vst.msk [vmem:[%s356 + $0x28] sm:$0xff] %vm1948, %v1921
      %1955 = vst.msk [vmem:[%s356 + $0x30] sm:$0xff] %vm1948, %v1922
      %1956 = vst.msk [vmem:[%s356 + $0x38] sm:$0xff] %vm1948, %v1923
      %1957 = vst.msk [vmem:[%s356 + $0x40] sm:$0xff] %vm1948, %v1924
      %1958 = vst.msk [vmem:[%s356 + $0x48] sm:$0xff] %vm1948, %v1925
      %1959 = vst.msk [vmem:[%s356 + $0x50] sm:$0xff] %vm1948, %v1926
      %1960 = vst.msk [vmem:[%s356 + $0x58] sm:$0xff] %vm1948, %v1927
      %1961 = vst.msk [vmem:[%s356 + $0x60] sm:$0xff] %vm1948, %v1928
      %1962 = vst.msk [vmem:[%s356 + $0x68] sm:$0xff] %vm1948, %v1929
      %1963 = vst.msk [vmem:[%s356 + $0x70] sm:$0xff] %vm1948, %v1930
      %1964 = vst.msk [vmem:[%s356 + $0x78] sm:$0xff] %vm1948, %v1931
      %1965 = vst.msk [vmem:[%s356 + $0x80] sm:$0xff] %vm1948, %v1932
      %1966 = vst.msk [vmem:[%s356 + $0x88] sm:$0xff] %vm1948, %v1933
      %1967 = vst.msk [vmem:[%s356 + $0x90] sm:$0xff] %vm1948, %v1934
      %1968 = vst.msk [vmem:[%s356 + $0x98] sm:$0xff] %vm1948, %v1935
      %1969 = vst.msk [vmem:[%s356 + $0xa0] sm:$0xff] %vm1948, %v1936
      %1970 = vst.msk [vmem:[%s356 + $0xa8] sm:$0xff] %vm1948, %v1937
      %1971 = vst.msk [vmem:[%s356 + $0xb0] sm:$0xff] %vm1948, %v1938
      %1972 = vst.msk [vmem:[%s356 + $0xb8] sm:$0xff] %vm1948, %v1939
      %1973 = vst.msk [vmem:[%s356 + $0xc0] sm:$0xff] %vm1948, %v1940
      %1974 = vst.msk [vmem:[%s356 + $0xc8] sm:$0xff] %vm1948, %v1941
      %1975 = vst.msk [vmem:[%s356 + $0xd0] sm:$0xff] %vm1948, %v1942
      %1976 = vst.msk [vmem:[%s356 + $0xd8] sm:$0xff] %vm1948, %v1943
      %1977 = vst.msk [vmem:[%s356 + $0xe0] sm:$0xff] %vm1948, %v1944
      %1978 = vst.msk [vmem:[%s356 + $0xe8] sm:$0xff] %vm1948, %v1945
      %1979 = vst.msk [vmem:[%s356 + $0xf0] sm:$0xff] %vm1948, %v1946
      %1980 = vst.msk [vmem:[%s356 + $0xf8] sm:$0xff] %vm1948, %v1947
      %s1981 = smul.u32 32, %s20
      %p1982 = scmp.lt.s32.totalorder %s1981, 127
      %s1983 = scalar_select %p1982, %s1981, 127
      %s1984 = smul.addr %s1983, 8
      %s1985 = scalar_lea.vmem %s9, %s1984
      // Predicated region
      $region57: #{tpu_custom_call.1} parent=55 // pred_check
        %p1986 = pneg %p237
      $region58: #{tpu_custom_call.1} parent=55 // pred_check_branch
        %1988 = sbr.rel (%p1986) target = $region60
      $region59: #{tpu_custom_call.1} parent=55 // pred_region
        %s1989 = smul.u32 32, %s20
      $region60: #{tpu_custom_call.1} parent=55 // pred_fallthru
        _
    $region56: #{tpu_custom_call.1} parent=5 // pred_fallthru
      _
    %p1990 = scmp.le.s32.totalorder 2, %s15
    // Predicated region
    $region61: #{tpu_custom_call.1} parent=5 // pred_check
      %p1991 = pneg %p1990
    $region62: #{tpu_custom_call.1} parent=5 // pred_check_branch
      %1993 = sbr.rel (%p1991) target = $region64
    $region63: #{tpu_custom_call.1} parent=5 // pred_region
      %s1994 = ssub.s32 %s15, 2
      // Predicated region
      $region65: #{tpu_custom_call.1} parent=63 // pred_check
        %p1995 = pneg %p243
      $region66: #{tpu_custom_call.1} parent=63 // pred_check_branch
        %1997 = sbr.rel (%p1995) target = $region68
      $region67: #{tpu_custom_call.1} parent=63 // pred_region
        %s1998 = smul.u32 32, %s21
        %p1999 = scmp.lt.s32.totalorder %s1998, 127
        %s2000 = scalar_select %p1999, %s1998, 127
        %s2001 = smul.addr %s2000, 8
        %s2002 = scalar_lea.vmem %s9, %s2001
      $region68: #{tpu_custom_call.1} parent=63 // pred_fallthru
        _
    $region64: #{tpu_custom_call.1} parent=5 // pred_fallthru
      _
  $region6: #{tpu_custom_call.1} parent=0 // loop_footer
    %s19 = sadd.s32 1, %s15
  $region7: #{tpu_custom_call.1} parent=0 // loop_footer_branch
    %14 = sbr.rel target = $region3
  $region8: #{tpu_custom_call.1} parent=0 // loop_exit
    _

</llo_original>
